<compile_context>
chip_gen: v7x
topology: tpu7x:2x2x1
jax: 0.10.0
libtpu: 0.0.40
codegen_flags: <defaults>
</compile_context>

<pallas_src>
import functools

import jax
import jax.numpy as jnp
from jax.experimental import pallas as pl
from jax.experimental.pallas import tpu as pltpu

EPS = 1e-5   # nn.BatchNorm2d default eps
_S = 8       # sublane-aligned interior offset inside the halo scratch


# ------------------------------ fused kernel ------------------------------- #
def _rrcnn_kernel(x_ref, w1_ref, b1_ref,
                  w_rb1_ref, g_rb1_ref, be_rb1_ref,
                  w_rb2_ref, g_rb2_ref, be_rb2_ref,
                  o_ref,
                  xp_ref,
                  *, B, H, W, C):
    f32 = jnp.float32
    bf16 = jnp.bfloat16
    BH = B * H
    WC = W * C
    inv_n = 1.0 / float(B * H * W)   # BN: biased batch stats over (N, H, W)

    # Zero ONLY the two halo rows (rows _S-1 and _S+H of each batch block);
    # the interior rows are fully overwritten by every cbr() staging store.
    zrow = jnp.zeros((B, 1, WC), f32)
    xp_ref[:, _S - 1:_S, :] = zrow
    xp_ref[:, _S + H:_S + H + 1, :] = zrow

    def cbr(z, w_ref, g_ref, be_ref):
        # z: (B*H, W*C) f32 activation slab (w-major, c-minor in the lane dim).
        # Stage at a sublane-aligned offset -> unmasked full-lane stores.
        xp_ref[:, _S:_S + H, :] = z.reshape(B, H, WC)

        # 3x3 conv as ONE matmul: concatenate the 3 dy-shifted slabs along the
        # lane axis (each piece is a full 128-lane multiple) and contract with
        # the stacked block-banded weight (dx shifts + W zero-padding folded in).
        xcat = jnp.concatenate(
            [xp_ref[:, _S - 1 + dy:_S - 1 + dy + H, :].reshape(BH, WC)
             for dy in range(3)],
            axis=-1)                                           # (B*H, 3*W*C)
        y = jnp.dot(xcat.astype(bf16), w_ref[...],
                    preferred_element_type=f32)                # (B*H, W*C) f32
        # (3x3 conv bias omitted: per-channel bias cancels exactly in batch-stat BN)

        # BatchNorm (training-mode batch stats) + affine + ReLU, all VPU/XLU:
        # sublane reduce -> log2(W) lane-roll tree.  After the tree, every lane
        # l holds the reduction over all lanes congruent to l mod C, i.e. the
        # per-channel statistic already broadcast in the (w*C + c) lane layout.
        mom = jnp.concatenate([jnp.sum(y, axis=0, keepdims=True),
                               jnp.sum(y * y, axis=0, keepdims=True)],
                              axis=0)                          # (2, W*C)
        shift = C
        while shift < WC:                                      # W is a power of 2
            mom = mom + pltpu.roll(mom, shift, axis=1)
            shift *= 2
        mom = mom * inv_n
        mean_l, ex2_l = mom[0:1, :], mom[1:2, :]               # (1, W*C) each
        var_l = jnp.maximum(ex2_l - mean_l * mean_l, 0.0)
        scale_l = g_ref[...] * jax.lax.rsqrt(var_l + EPS)      # gamma pre-tiled (1, W*C)
        shift_l = be_ref[...] - mean_l * scale_l               # beta  pre-tiled (1, W*C)
        return jnp.maximum(y * scale_l + shift_l, 0.0)

    def recurrent(z, w_ref, g_ref, be_ref):
        # t = 2: x1 = conv(x); x1 = conv(x + x1); x1 = conv(x + x1)
        x1 = cbr(z, w_ref, g_ref, be_ref)
        x1 = cbr(z + x1, w_ref, g_ref, be_ref)
        x1 = cbr(z + x1, w_ref, g_ref, be_ref)
        return x1

    # Conv_1x1: (B*H, W*Cin) x (W*Cin, W*C) block-diagonal weight (bf16 MXU, f32 acc).
    x0 = jnp.dot(x_ref[...].astype(bf16), w1_ref[...],
                 preferred_element_type=f32) + b1_ref[...]

    h = recurrent(x0, w_rb1_ref, g_rb1_ref, be_rb1_ref)
    h = recurrent(h, w_rb2_ref, g_rb2_ref, be_rb2_ref)

    o_ref[...] = (x0 + h).astype(o_ref.dtype)                  # residual, lane-dense store


# --------------------- one-time parameter preprocessing -------------------- #
def pack_params(params, W):
    """Hoisted out of the per-forward path: build kernel-ready (bf16) weights once."""
    f32, bf16 = jnp.float32, jnp.bfloat16
    C = params["w1x1"].shape[1]

    # 1x1 conv as a block-diagonal (W*Cin, W*Cout) matmul.
    bigw1 = jnp.kron(jnp.eye(W, dtype=f32), params["w1x1"]).astype(bf16)
    b1_l = jnp.tile(params["b1x1"].reshape(1, C), (1, W)).astype(f32)      # (1, W*C)

    def big3x3(w):
        # w: (3, 3, Cin=C, Cout=C) -> (3*W*C, W*C); dx shifts + zero padding in W
        # folded in via shifted identities; stacked along K for the single dot.
        blocks = [sum(jnp.kron(jnp.eye(W, k=1 - dx, dtype=f32), w[dy, dx])
                      for dx in range(3))
                  for dy in range(3)]
        return jnp.concatenate(blocks, axis=0).astype(bf16)

    def rb(p):
        w, _b, g, be = p   # conv bias _b dropped: cancels inside batch-stat BN
        return (big3x3(w),
                jnp.tile(g.reshape(1, C), (1, W)).astype(f32),
                jnp.tile(be.reshape(1, C), (1, W)).astype(f32))

    w_rb1, g_rb1, be_rb1 = rb(params["rb1"])
    w_rb2, g_rb2, be_rb2 = rb(params["rb2"])
    return {"bigw1": bigw1, "b1_l": b1_l,
            "w_rb1": w_rb1, "g_rb1": g_rb1, "be_rb1": be_rb1,
            "w_rb2": w_rb2, "g_rb2": g_rb2, "be_rb2": be_rb2}


# --------------------------------- forward --------------------------------- #
@jax.jit
def rrcnn_block(x_nchw, kp):
    B, Cin, H, W = x_nchw.shape
    WC = kp["b1_l"].shape[1]
    C = WC // W
    assert W & (W - 1) == 0, "lane-roll BN reduction assumes W is a power of 2"
    # TODO(synk): general W needs a different per-channel reduction (or a grid).

    # NCHW -> NHWC -> (B*H, W*Cin) lane-dense slab (layout plumbing only).
    x2d = jnp.transpose(x_nchw, (0, 2, 3, 1)).reshape(B * H, W * Cin)

    # Halo scratch: interior at sublane offset _S, height rounded to a multiple
    # of 8 so every per-batch block (and hence every store) is tile-aligned.
    hp = _S + ((H + 1 + 7) // 8) * 8

    kern = functools.partial(_rrcnn_kernel, B=B, H=H, W=W, C=C)
    vmem = pl.BlockSpec(memory_space=pltpu.MemorySpace.VMEM)

    out2d = pl.pallas_call(
        kern,
        out_shape=jax.ShapeDtypeStruct((B * H, WC), x_nchw.dtype),
        in_specs=[vmem] * 9,
        out_specs=vmem,
        scratch_shapes=[pltpu.VMEM((B, hp, WC), jnp.float32)],   # H-halo buffer
    )(x2d, kp["bigw1"], kp["b1_l"],
      kp["w_rb1"], kp["g_rb1"], kp["be_rb1"],
      kp["w_rb2"], kp["g_rb2"], kp["be_rb2"])

    # (B*H, W*C) -> NHWC -> NCHW
    return jnp.transpose(out2d.reshape(B, H, W, C), (0, 3, 1, 2))


# ------------------------------ parameter init ----------------------------- #
def init_params(key, ch_in, ch_out):
    ks = jax.random.split(key, 6)

    def rb_params(kw, kb):
        w = jax.random.normal(kw, (3, 3, ch_out, ch_out), jnp.float32) * 0.1
        b = jax.random.normal(kb, (1, ch_out), jnp.float32) * 0.1   # unused by forward (BN cancels it)
        gamma = jnp.ones((1, ch_out), jnp.float32)     # BN weight
        beta = jnp.zeros((1, ch_out), jnp.float32)     # BN bias
        return (w, b, gamma, beta)

    return {
        "w1x1": jax.random.normal(ks[0], (ch_in, ch_out), jnp.float32) * 0.1,
        "b1x1": jax.random.normal(ks[1], (1, ch_out), jnp.float32) * 0.1,
        "rb1": rb_params(ks[2], ks[3]),
        "rb2": rb_params(ks[4], ks[5]),
    }


if __name__ == "__main__":
    key = jax.random.PRNGKey(0)
    kx, kp = jax.random.split(key)
    ch_in, ch_out = 4, 8
    x = jax.random.normal(kx, (2, ch_in, 16, 16), jnp.float32)  # NCHW like torch
    params = init_params(kp, ch_in, ch_out)
    packed = pack_params(params, W=16)     # one-time weight preprocessing, outside the forward path

    out = rrcnn_block(x, packed)
    jax.block_until_ready(out)
    assert out.shape == (2, ch_out, 16, 16)
    assert out.dtype == jnp.float32
    print("KERNEL_OK")
</pallas_src>

<mosaic_0001>
module attributes {stable_mosaic.version = 11 : i64} {
  func.func @_rrcnn_kernel(%arg0: memref<32x64xf32, #tpu.memory_space<vmem>>, %arg1: memref<64x128xbf16, #tpu.memory_space<vmem>>, %arg2: memref<1x128xf32, #tpu.memory_space<vmem>>, %arg3: memref<384x128xbf16, #tpu.memory_space<vmem>>, %arg4: memref<1x128xf32, #tpu.memory_space<vmem>>, %arg5: memref<1x128xf32, #tpu.memory_space<vmem>>, %arg6: memref<384x128xbf16, #tpu.memory_space<vmem>>, %arg7: memref<1x128xf32, #tpu.memory_space<vmem>>, %arg8: memref<1x128xf32, #tpu.memory_space<vmem>>, %arg9: memref<32x128xf32, #tpu.memory_space<vmem>>, %arg10: memref<2x32x128xf32, #tpu.memory_space<vmem>>) attributes {dimension_semantics = [], scalar_prefetch = 0 : i64, scratch_operands = 1 : i64, tpu.core_type = #tpu.core_type<tc>} {
    %cst = arith.constant 0.000000e+00 : f32
    %0 = vector.broadcast %cst : f32 to vector<2x1x128xf32>
    %c0 = arith.constant 0 : index
    %c7 = arith.constant 7 : index
    %c0_0 = arith.constant 0 : index
    %1 = vector.load %arg10[%c0, %c7, %c0_0] : memref<2x32x128xf32, #tpu.memory_space<vmem>>, vector<2x1x128xf32>
    tpu.vector_store %arg10[%c0, %c7, %c0_0], %0 {strides = array<i32>} : memref<2x32x128xf32, #tpu.memory_space<vmem>>, vector<2x1x128xf32>,
    %c0_1 = arith.constant 0 : index
    %c24 = arith.constant 24 : index
    %c0_2 = arith.constant 0 : index
    %2 = vector.load %arg10[%c0_1, %c24, %c0_2] : memref<2x32x128xf32, #tpu.memory_space<vmem>>, vector<2x1x128xf32>
    tpu.vector_store %arg10[%c0_1, %c24, %c0_2], %0 {strides = array<i32>} : memref<2x32x128xf32, #tpu.memory_space<vmem>>, vector<2x1x128xf32>,
    %c0_3 = arith.constant 0 : index
    %c0_4 = arith.constant 0 : index
    %3 = vector.load %arg0[%c0_3, %c0_4] : memref<32x64xf32, #tpu.memory_space<vmem>>, vector<32x64xf32>
    %4 = arith.truncf %3 : vector<32x64xf32> to vector<32x64xbf16>
    %c0_5 = arith.constant 0 : index
    %c0_6 = arith.constant 0 : index
    %5 = vector.load %arg1[%c0_5, %c0_6] : memref<64x128xbf16, #tpu.memory_space<vmem>>, vector<64x128xbf16>
    %cst_7 = arith.constant dense<0.000000e+00> : vector<32x128xf32>
    %6 = tpu.matmul %4, %5, %cst_7 {dimension_numbers = #tpu.dot_dimension_numbers<[1], [0], [0], [1], [0, 0, 1, 1], [], []>} : vector<32x64xbf16>, vector<64x128xbf16>, vector<32x128xf32> -> vector<32x128xf32>
    %c0_8 = arith.constant 0 : index
    %c0_9 = arith.constant 0 : index
    %7 = vector.load %arg2[%c0_8, %c0_9] : memref<1x128xf32, #tpu.memory_space<vmem>>, vector<1x128xf32>
    %8 = vector.broadcast %7 : vector<1x128xf32> to vector<32x128xf32>
    %9 = arith.addf %6, %8 : vector<32x128xf32>
    %10 = vector.shape_cast %9 : vector<32x128xf32> to vector<2x16x128xf32>
    %c0_10 = arith.constant 0 : index
    %c8 = arith.constant 8 : index
    %c0_11 = arith.constant 0 : index
    %11 = vector.load %arg10[%c0_10, %c8, %c0_11] : memref<2x32x128xf32, #tpu.memory_space<vmem>>, vector<2x16x128xf32>
    tpu.vector_store %arg10[%c0_10, %c8, %c0_11], %10 {strides = array<i32>} : memref<2x32x128xf32, #tpu.memory_space<vmem>>, vector<2x16x128xf32>,
    %c0_12 = arith.constant 0 : index
    %c7_13 = arith.constant 7 : index
    %c0_14 = arith.constant 0 : index
    %12 = vector.load %arg10[%c0_12, %c7_13, %c0_14] : memref<2x32x128xf32, #tpu.memory_space<vmem>>, vector<2x16x128xf32>
    %13 = vector.shape_cast %12 : vector<2x16x128xf32> to vector<32x128xf32>
    %c0_15 = arith.constant 0 : index
    %c8_16 = arith.constant 8 : index
    %c0_17 = arith.constant 0 : index
    %14 = vector.load %arg10[%c0_15, %c8_16, %c0_17] : memref<2x32x128xf32, #tpu.memory_space<vmem>>, vector<2x16x128xf32>
    %15 = vector.shape_cast %14 : vector<2x16x128xf32> to vector<32x128xf32>
    %c0_18 = arith.constant 0 : index
    %c9 = arith.constant 9 : index
    %c0_19 = arith.constant 0 : index
    %16 = vector.load %arg10[%c0_18, %c9, %c0_19] : memref<2x32x128xf32, #tpu.memory_space<vmem>>, vector<2x16x128xf32>
    %17 = vector.shape_cast %16 : vector<2x16x128xf32> to vector<32x128xf32>
    %18 = tpu.concatenate %13, %15, %17 in 1 : vector<32x128xf32>, vector<32x128xf32>, vector<32x128xf32> -> vector<32x384xf32>
    %19 = arith.truncf %18 : vector<32x384xf32> to vector<32x384xbf16>
    %c0_20 = arith.constant 0 : index
    %c0_21 = arith.constant 0 : index
    %20 = vector.load %arg3[%c0_20, %c0_21] : memref<384x128xbf16, #tpu.memory_space<vmem>>, vector<384x128xbf16>
    %cst_22 = arith.constant dense<0.000000e+00> : vector<32x128xf32>
    %21 = tpu.matmul %19, %20, %cst_22 {dimension_numbers = #tpu.dot_dimension_numbers<[1], [0], [0], [1], [0, 0, 1, 1], [], []>} : vector<32x384xbf16>, vector<384x128xbf16>, vector<32x128xf32> -> vector<32x128xf32>
    %cst_23 = arith.constant dense<0.000000e+00> : vector<128xf32>
    %22 = vector.multi_reduction <add>, %21, %cst_23 [0] : vector<32x128xf32> to vector<128xf32>
    %23 = vector.shape_cast %22 : vector<128xf32> to vector<1x128xf32>
    %24 = arith.mulf %21, %21 : vector<32x128xf32>
    %cst_24 = arith.constant dense<0.000000e+00> : vector<128xf32>
    %25 = vector.multi_reduction <add>, %24, %cst_24 [0] : vector<32x128xf32> to vector<128xf32>
    %26 = vector.shape_cast %25 : vector<128xf32> to vector<1x128xf32>
    %27 = tpu.concatenate %23, %26 in 0 : vector<1x128xf32>, vector<1x128xf32> -> vector<2x128xf32>
    %c8_i32 = arith.constant 8 : i32
    %28 = tpu.dynamic_rotate %27 by %c8_i32 dim 1 : vector<2x128xf32>, i32 -> vector<2x128xf32>
    %29 = arith.addf %27, %28 : vector<2x128xf32>
    %c16_i32 = arith.constant 16 : i32
    %30 = tpu.dynamic_rotate %29 by %c16_i32 dim 1 : vector<2x128xf32>, i32 -> vector<2x128xf32>
    %31 = arith.addf %29, %30 : vector<2x128xf32>
    %c32_i32 = arith.constant 32 : i32
    %32 = tpu.dynamic_rotate %31 by %c32_i32 dim 1 : vector<2x128xf32>, i32 -> vector<2x128xf32>
    %33 = arith.addf %31, %32 : vector<2x128xf32>
    %c64_i32 = arith.constant 64 : i32
    %34 = tpu.dynamic_rotate %33 by %c64_i32 dim 1 : vector<2x128xf32>, i32 -> vector<2x128xf32>
    %35 = arith.addf %33, %34 : vector<2x128xf32>
    %cst_25 = arith.constant 0.001953125 : f32
    %36 = vector.broadcast %cst_25 : f32 to vector<2x128xf32>
    %37 = arith.mulf %35, %36 : vector<2x128xf32>
    %38 = vector.extract_strided_slice %37 {offsets = [0, 0], sizes = [1, 128], strides = [1, 1]} : vector<2x128xf32> to vector<1x128xf32>
    %39 = vector.extract_strided_slice %37 {offsets = [1, 0], sizes = [1, 128], strides = [1, 1]} : vector<2x128xf32> to vector<1x128xf32>
    %40 = arith.mulf %38, %38 : vector<1x128xf32>
    %41 = arith.subf %39, %40 : vector<1x128xf32>
    %cst_26 = arith.constant 0.000000e+00 : f32
    %42 = vector.broadcast %cst_26 : f32 to vector<1x128xf32>
    %43 = arith.maximumf %41, %42 : vector<1x128xf32>
    %c0_27 = arith.constant 0 : index
    %c0_28 = arith.constant 0 : index
    %44 = vector.load %arg4[%c0_27, %c0_28] : memref<1x128xf32, #tpu.memory_space<vmem>>, vector<1x128xf32>
    %cst_29 = arith.constant 9.99999974E-6 : f32
    %45 = vector.broadcast %cst_29 : f32 to vector<1x128xf32>
    %46 = arith.addf %43, %45 : vector<1x128xf32>
    %47 = math.rsqrt %46 : vector<1x128xf32>
    %48 = arith.mulf %44, %47 : vector<1x128xf32>
    %c0_30 = arith.constant 0 : index
    %c0_31 = arith.constant 0 : index
    %49 = vector.load %arg5[%c0_30, %c0_31] : memref<1x128xf32, #tpu.memory_space<vmem>>, vector<1x128xf32>
    %50 = arith.mulf %38, %48 : vector<1x128xf32>
    %51 = arith.subf %49, %50 : vector<1x128xf32>
    %52 = vector.broadcast %48 : vector<1x128xf32> to vector<32x128xf32>
    %53 = arith.mulf %21, %52 : vector<32x128xf32>
    %54 = vector.broadcast %51 : vector<1x128xf32> to vector<32x128xf32>
    %55 = arith.addf %53, %54 : vector<32x128xf32>
    %cst_32 = arith.constant 0.000000e+00 : f32
    %56 = vector.broadcast %cst_32 : f32 to vector<32x128xf32>
    %57 = arith.maximumf %55, %56 : vector<32x128xf32>
    %58 = arith.addf %9, %57 : vector<32x128xf32>
    %59 = vector.shape_cast %58 : vector<32x128xf32> to vector<2x16x128xf32>
    %c0_33 = arith.constant 0 : index
    %c8_34 = arith.constant 8 : index
    %c0_35 = arith.constant 0 : index
    %60 = vector.load %arg10[%c0_33, %c8_34, %c0_35] : memref<2x32x128xf32, #tpu.memory_space<vmem>>, vector<2x16x128xf32>
    tpu.vector_store %arg10[%c0_33, %c8_34, %c0_35], %59 {strides = array<i32>} : memref<2x32x128xf32, #tpu.memory_space<vmem>>, vector<2x16x128xf32>,
    %c0_36 = arith.constant 0 : index
    %c7_37 = arith.constant 7 : index
    %c0_38 = arith.constant 0 : index
    %61 = vector.load %arg10[%c0_36, %c7_37, %c0_38] : memref<2x32x128xf32, #tpu.memory_space<vmem>>, vector<2x16x128xf32>
    %62 = vector.shape_cast %61 : vector<2x16x128xf32> to vector<32x128xf32>
    %c0_39 = arith.constant 0 : index
    %c8_40 = arith.constant 8 : index
    %c0_41 = arith.constant 0 : index
    %63 = vector.load %arg10[%c0_39, %c8_40, %c0_41] : memref<2x32x128xf32, #tpu.memory_space<vmem>>, vector<2x16x128xf32>
    %64 = vector.shape_cast %63 : vector<2x16x128xf32> to vector<32x128xf32>
    %c0_42 = arith.constant 0 : index
    %c9_43 = arith.constant 9 : index
    %c0_44 = arith.constant 0 : index
    %65 = vector.load %arg10[%c0_42, %c9_43, %c0_44] : memref<2x32x128xf32, #tpu.memory_space<vmem>>, vector<2x16x128xf32>
    %66 = vector.shape_cast %65 : vector<2x16x128xf32> to vector<32x128xf32>
    %67 = tpu.concatenate %62, %64, %66 in 1 : vector<32x128xf32>, vector<32x128xf32>, vector<32x128xf32> -> vector<32x384xf32>
    %68 = arith.truncf %67 : vector<32x384xf32> to vector<32x384xbf16>
    %c0_45 = arith.constant 0 : index
    %c0_46 = arith.constant 0 : index
    %69 = vector.load %arg3[%c0_45, %c0_46] : memref<384x128xbf16, #tpu.memory_space<vmem>>, vector<384x128xbf16>
    %cst_47 = arith.constant dense<0.000000e+00> : vector<32x128xf32>
    %70 = tpu.matmul %68, %69, %cst_47 {dimension_numbers = #tpu.dot_dimension_numbers<[1], [0], [0], [1], [0, 0, 1, 1], [], []>} : vector<32x384xbf16>, vector<384x128xbf16>, vector<32x128xf32> -> vector<32x128xf32>
    %cst_48 = arith.constant dense<0.000000e+00> : vector<128xf32>
    %71 = vector.multi_reduction <add>, %70, %cst_48 [0] : vector<32x128xf32> to vector<128xf32>
    %72 = vector.shape_cast %71 : vector<128xf32> to vector<1x128xf32>
    %73 = arith.mulf %70, %70 : vector<32x128xf32>
    %cst_49 = arith.constant dense<0.000000e+00> : vector<128xf32>
    %74 = vector.multi_reduction <add>, %73, %cst_49 [0] : vector<32x128xf32> to vector<128xf32>
    %75 = vector.shape_cast %74 : vector<128xf32> to vector<1x128xf32>
    %76 = tpu.concatenate %72, %75 in 0 : vector<1x128xf32>, vector<1x128xf32> -> vector<2x128xf32>
    %c8_i32_50 = arith.constant 8 : i32
    %77 = tpu.dynamic_rotate %76 by %c8_i32_50 dim 1 : vector<2x128xf32>, i32 -> vector<2x128xf32>
    %78 = arith.addf %76, %77 : vector<2x128xf32>
    %c16_i32_51 = arith.constant 16 : i32
    %79 = tpu.dynamic_rotate %78 by %c16_i32_51 dim 1 : vector<2x128xf32>, i32 -> vector<2x128xf32>
    %80 = arith.addf %78, %79 : vector<2x128xf32>
    %c32_i32_52 = arith.constant 32 : i32
    %81 = tpu.dynamic_rotate %80 by %c32_i32_52 dim 1 : vector<2x128xf32>, i32 -> vector<2x128xf32>
    %82 = arith.addf %80, %81 : vector<2x128xf32>
    %c64_i32_53 = arith.constant 64 : i32
    %83 = tpu.dynamic_rotate %82 by %c64_i32_53 dim 1 : vector<2x128xf32>, i32 -> vector<2x128xf32>
    %84 = arith.addf %82, %83 : vector<2x128xf32>
    %cst_54 = arith.constant 0.001953125 : f32
    %85 = vector.broadcast %cst_54 : f32 to vector<2x128xf32>
    %86 = arith.mulf %84, %85 : vector<2x128xf32>
    %87 = vector.extract_strided_slice %86 {offsets = [0, 0], sizes = [1, 128], strides = [1, 1]} : vector<2x128xf32> to vector<1x128xf32>
    %88 = vector.extract_strided_slice %86 {offsets = [1, 0], sizes = [1, 128], strides = [1, 1]} : vector<2x128xf32> to vector<1x128xf32>
    %89 = arith.mulf %87, %87 : vector<1x128xf32>
    %90 = arith.subf %88, %89 : vector<1x128xf32>
    %cst_55 = arith.constant 0.000000e+00 : f32
    %91 = vector.broadcast %cst_55 : f32 to vector<1x128xf32>
    %92 = arith.maximumf %90, %91 : vector<1x128xf32>
    %c0_56 = arith.constant 0 : index
    %c0_57 = arith.constant 0 : index
    %93 = vector.load %arg4[%c0_56, %c0_57] : memref<1x128xf32, #tpu.memory_space<vmem>>, vector<1x128xf32>
    %cst_58 = arith.constant 9.99999974E-6 : f32
    %94 = vector.broadcast %cst_58 : f32 to vector<1x128xf32>
    %95 = arith.addf %92, %94 : vector<1x128xf32>
    %96 = math.rsqrt %95 : vector<1x128xf32>
    %97 = arith.mulf %93, %96 : vector<1x128xf32>
    %c0_59 = arith.constant 0 : index
    %c0_60 = arith.constant 0 : index
    %98 = vector.load %arg5[%c0_59, %c0_60] : memref<1x128xf32, #tpu.memory_space<vmem>>, vector<1x128xf32>
    %99 = arith.mulf %87, %97 : vector<1x128xf32>
    %100 = arith.subf %98, %99 : vector<1x128xf32>
    %101 = vector.broadcast %97 : vector<1x128xf32> to vector<32x128xf32>
    %102 = arith.mulf %70, %101 : vector<32x128xf32>
    %103 = vector.broadcast %100 : vector<1x128xf32> to vector<32x128xf32>
    %104 = arith.addf %102, %103 : vector<32x128xf32>
    %cst_61 = arith.constant 0.000000e+00 : f32
    %105 = vector.broadcast %cst_61 : f32 to vector<32x128xf32>
    %106 = arith.maximumf %104, %105 : vector<32x128xf32>
    %107 = arith.addf %9, %106 : vector<32x128xf32>
    %108 = vector.shape_cast %107 : vector<32x128xf32> to vector<2x16x128xf32>
    %c0_62 = arith.constant 0 : index
    %c8_63 = arith.constant 8 : index
    %c0_64 = arith.constant 0 : index
    %109 = vector.load %arg10[%c0_62, %c8_63, %c0_64] : memref<2x32x128xf32, #tpu.memory_space<vmem>>, vector<2x16x128xf32>
    tpu.vector_store %arg10[%c0_62, %c8_63, %c0_64], %108 {strides = array<i32>} : memref<2x32x128xf32, #tpu.memory_space<vmem>>, vector<2x16x128xf32>,
    %c0_65 = arith.constant 0 : index
    %c7_66 = arith.constant 7 : index
    %c0_67 = arith.constant 0 : index
    %110 = vector.load %arg10[%c0_65, %c7_66, %c0_67] : memref<2x32x128xf32, #tpu.memory_space<vmem>>, vector<2x16x128xf32>
    %111 = vector.shape_cast %110 : vector<2x16x128xf32> to vector<32x128xf32>
    %c0_68 = arith.constant 0 : index
    %c8_69 = arith.constant 8 : index
    %c0_70 = arith.constant 0 : index
    %112 = vector.load %arg10[%c0_68, %c8_69, %c0_70] : memref<2x32x128xf32, #tpu.memory_space<vmem>>, vector<2x16x128xf32>
    %113 = vector.shape_cast %112 : vector<2x16x128xf32> to vector<32x128xf32>
    %c0_71 = arith.constant 0 : index
    %c9_72 = arith.constant 9 : index
    %c0_73 = arith.constant 0 : index
    %114 = vector.load %arg10[%c0_71, %c9_72, %c0_73] : memref<2x32x128xf32, #tpu.memory_space<vmem>>, vector<2x16x128xf32>
    %115 = vector.shape_cast %114 : vector<2x16x128xf32> to vector<32x128xf32>
    %116 = tpu.concatenate %111, %113, %115 in 1 : vector<32x128xf32>, vector<32x128xf32>, vector<32x128xf32> -> vector<32x384xf32>
    %117 = arith.truncf %116 : vector<32x384xf32> to vector<32x384xbf16>
    %c0_74 = arith.constant 0 : index
    %c0_75 = arith.constant 0 : index
    %118 = vector.load %arg3[%c0_74, %c0_75] : memref<384x128xbf16, #tpu.memory_space<vmem>>, vector<384x128xbf16>
    %cst_76 = arith.constant dense<0.000000e+00> : vector<32x128xf32>
    %119 = tpu.matmul %117, %118, %cst_76 {dimension_numbers = #tpu.dot_dimension_numbers<[1], [0], [0], [1], [0, 0, 1, 1], [], []>} : vector<32x384xbf16>, vector<384x128xbf16>, vector<32x128xf32> -> vector<32x128xf32>
    %cst_77 = arith.constant dense<0.000000e+00> : vector<128xf32>
    %120 = vector.multi_reduction <add>, %119, %cst_77 [0] : vector<32x128xf32> to vector<128xf32>
    %121 = vector.shape_cast %120 : vector<128xf32> to vector<1x128xf32>
    %122 = arith.mulf %119, %119 : vector<32x128xf32>
    %cst_78 = arith.constant dense<0.000000e+00> : vector<128xf32>
    %123 = vector.multi_reduction <add>, %122, %cst_78 [0] : vector<32x128xf32> to vector<128xf32>
    %124 = vector.shape_cast %123 : vector<128xf32> to vector<1x128xf32>
    %125 = tpu.concatenate %121, %124 in 0 : vector<1x128xf32>, vector<1x128xf32> -> vector<2x128xf32>
    %c8_i32_79 = arith.constant 8 : i32
    %126 = tpu.dynamic_rotate %125 by %c8_i32_79 dim 1 : vector<2x128xf32>, i32 -> vector<2x128xf32>
    %127 = arith.addf %125, %126 : vector<2x128xf32>
    %c16_i32_80 = arith.constant 16 : i32
    %128 = tpu.dynamic_rotate %127 by %c16_i32_80 dim 1 : vector<2x128xf32>, i32 -> vector<2x128xf32>
    %129 = arith.addf %127, %128 : vector<2x128xf32>
    %c32_i32_81 = arith.constant 32 : i32
    %130 = tpu.dynamic_rotate %129 by %c32_i32_81 dim 1 : vector<2x128xf32>, i32 -> vector<2x128xf32>
    %131 = arith.addf %129, %130 : vector<2x128xf32>
    %c64_i32_82 = arith.constant 64 : i32
    %132 = tpu.dynamic_rotate %131 by %c64_i32_82 dim 1 : vector<2x128xf32>, i32 -> vector<2x128xf32>
    %133 = arith.addf %131, %132 : vector<2x128xf32>
    %cst_83 = arith.constant 0.001953125 : f32
    %134 = vector.broadcast %cst_83 : f32 to vector<2x128xf32>
    %135 = arith.mulf %133, %134 : vector<2x128xf32>
    %136 = vector.extract_strided_slice %135 {offsets = [0, 0], sizes = [1, 128], strides = [1, 1]} : vector<2x128xf32> to vector<1x128xf32>
    %137 = vector.extract_strided_slice %135 {offsets = [1, 0], sizes = [1, 128], strides = [1, 1]} : vector<2x128xf32> to vector<1x128xf32>
    %138 = arith.mulf %136, %136 : vector<1x128xf32>
    %139 = arith.subf %137, %138 : vector<1x128xf32>
    %cst_84 = arith.constant 0.000000e+00 : f32
    %140 = vector.broadcast %cst_84 : f32 to vector<1x128xf32>
    %141 = arith.maximumf %139, %140 : vector<1x128xf32>
    %c0_85 = arith.constant 0 : index
    %c0_86 = arith.constant 0 : index
    %142 = vector.load %arg4[%c0_85, %c0_86] : memref<1x128xf32, #tpu.memory_space<vmem>>, vector<1x128xf32>
    %cst_87 = arith.constant 9.99999974E-6 : f32
    %143 = vector.broadcast %cst_87 : f32 to vector<1x128xf32>
    %144 = arith.addf %141, %143 : vector<1x128xf32>
    %145 = math.rsqrt %144 : vector<1x128xf32>
    %146 = arith.mulf %142, %145 : vector<1x128xf32>
    %c0_88 = arith.constant 0 : index
    %c0_89 = arith.constant 0 : index
    %147 = vector.load %arg5[%c0_88, %c0_89] : memref<1x128xf32, #tpu.memory_space<vmem>>, vector<1x128xf32>
    %148 = arith.mulf %136, %146 : vector<1x128xf32>
    %149 = arith.subf %147, %148 : vector<1x128xf32>
    %150 = vector.broadcast %146 : vector<1x128xf32> to vector<32x128xf32>
    %151 = arith.mulf %119, %150 : vector<32x128xf32>
    %152 = vector.broadcast %149 : vector<1x128xf32> to vector<32x128xf32>
    %153 = arith.addf %151, %152 : vector<32x128xf32>
    %cst_90 = arith.constant 0.000000e+00 : f32
    %154 = vector.broadcast %cst_90 : f32 to vector<32x128xf32>
    %155 = arith.maximumf %153, %154 : vector<32x128xf32>
    %156 = vector.shape_cast %155 : vector<32x128xf32> to vector<2x16x128xf32>
    %c0_91 = arith.constant 0 : index
    %c8_92 = arith.constant 8 : index
    %c0_93 = arith.constant 0 : index
    %157 = vector.load %arg10[%c0_91, %c8_92, %c0_93] : memref<2x32x128xf32, #tpu.memory_space<vmem>>, vector<2x16x128xf32>
    tpu.vector_store %arg10[%c0_91, %c8_92, %c0_93], %156 {strides = array<i32>} : memref<2x32x128xf32, #tpu.memory_space<vmem>>, vector<2x16x128xf32>,
    %c0_94 = arith.constant 0 : index
    %c7_95 = arith.constant 7 : index
    %c0_96 = arith.constant 0 : index
    %158 = vector.load %arg10[%c0_94, %c7_95, %c0_96] : memref<2x32x128xf32, #tpu.memory_space<vmem>>, vector<2x16x128xf32>
    %159 = vector.shape_cast %158 : vector<2x16x128xf32> to vector<32x128xf32>
    %c0_97 = arith.constant 0 : index
    %c8_98 = arith.constant 8 : index
    %c0_99 = arith.constant 0 : index
    %160 = vector.load %arg10[%c0_97, %c8_98, %c0_99] : memref<2x32x128xf32, #tpu.memory_space<vmem>>, vector<2x16x128xf32>
    %161 = vector.shape_cast %160 : vector<2x16x128xf32> to vector<32x128xf32>
    %c0_100 = arith.constant 0 : index
    %c9_101 = arith.constant 9 : index
    %c0_102 = arith.constant 0 : index
    %162 = vector.load %arg10[%c0_100, %c9_101, %c0_102] : memref<2x32x128xf32, #tpu.memory_space<vmem>>, vector<2x16x128xf32>
    %163 = vector.shape_cast %162 : vector<2x16x128xf32> to vector<32x128xf32>
    %164 = tpu.concatenate %159, %161, %163 in 1 : vector<32x128xf32>, vector<32x128xf32>, vector<32x128xf32> -> vector<32x384xf32>
    %165 = arith.truncf %164 : vector<32x384xf32> to vector<32x384xbf16>
    %c0_103 = arith.constant 0 : index
    %c0_104 = arith.constant 0 : index
    %166 = vector.load %arg6[%c0_103, %c0_104] : memref<384x128xbf16, #tpu.memory_space<vmem>>, vector<384x128xbf16>
    %cst_105 = arith.constant dense<0.000000e+00> : vector<32x128xf32>
    %167 = tpu.matmul %165, %166, %cst_105 {dimension_numbers = #tpu.dot_dimension_numbers<[1], [0], [0], [1], [0, 0, 1, 1], [], []>} : vector<32x384xbf16>, vector<384x128xbf16>, vector<32x128xf32> -> vector<32x128xf32>
    %cst_106 = arith.constant dense<0.000000e+00> : vector<128xf32>
    %168 = vector.multi_reduction <add>, %167, %cst_106 [0] : vector<32x128xf32> to vector<128xf32>
    %169 = vector.shape_cast %168 : vector<128xf32> to vector<1x128xf32>
    %170 = arith.mulf %167, %167 : vector<32x128xf32>
    %cst_107 = arith.constant dense<0.000000e+00> : vector<128xf32>
    %171 = vector.multi_reduction <add>, %170, %cst_107 [0] : vector<32x128xf32> to vector<128xf32>
    %172 = vector.shape_cast %171 : vector<128xf32> to vector<1x128xf32>
    %173 = tpu.concatenate %169, %172 in 0 : vector<1x128xf32>, vector<1x128xf32> -> vector<2x128xf32>
    %c8_i32_108 = arith.constant 8 : i32
    %174 = tpu.dynamic_rotate %173 by %c8_i32_108 dim 1 : vector<2x128xf32>, i32 -> vector<2x128xf32>
    %175 = arith.addf %173, %174 : vector<2x128xf32>
    %c16_i32_109 = arith.constant 16 : i32
    %176 = tpu.dynamic_rotate %175 by %c16_i32_109 dim 1 : vector<2x128xf32>, i32 -> vector<2x128xf32>
    %177 = arith.addf %175, %176 : vector<2x128xf32>
    %c32_i32_110 = arith.constant 32 : i32
    %178 = tpu.dynamic_rotate %177 by %c32_i32_110 dim 1 : vector<2x128xf32>, i32 -> vector<2x128xf32>
    %179 = arith.addf %177, %178 : vector<2x128xf32>
    %c64_i32_111 = arith.constant 64 : i32
    %180 = tpu.dynamic_rotate %179 by %c64_i32_111 dim 1 : vector<2x128xf32>, i32 -> vector<2x128xf32>
    %181 = arith.addf %179, %180 : vector<2x128xf32>
    %cst_112 = arith.constant 0.001953125 : f32
    %182 = vector.broadcast %cst_112 : f32 to vector<2x128xf32>
    %183 = arith.mulf %181, %182 : vector<2x128xf32>
    %184 = vector.extract_strided_slice %183 {offsets = [0, 0], sizes = [1, 128], strides = [1, 1]} : vector<2x128xf32> to vector<1x128xf32>
    %185 = vector.extract_strided_slice %183 {offsets = [1, 0], sizes = [1, 128], strides = [1, 1]} : vector<2x128xf32> to vector<1x128xf32>
    %186 = arith.mulf %184, %184 : vector<1x128xf32>
    %187 = arith.subf %185, %186 : vector<1x128xf32>
    %cst_113 = arith.constant 0.000000e+00 : f32
    %188 = vector.broadcast %cst_113 : f32 to vector<1x128xf32>
    %189 = arith.maximumf %187, %188 : vector<1x128xf32>
    %c0_114 = arith.constant 0 : index
    %c0_115 = arith.constant 0 : index
    %190 = vector.load %arg7[%c0_114, %c0_115] : memref<1x128xf32, #tpu.memory_space<vmem>>, vector<1x128xf32>
    %cst_116 = arith.constant 9.99999974E-6 : f32
    %191 = vector.broadcast %cst_116 : f32 to vector<1x128xf32>
    %192 = arith.addf %189, %191 : vector<1x128xf32>
    %193 = math.rsqrt %192 : vector<1x128xf32>
    %194 = arith.mulf %190, %193 : vector<1x128xf32>
    %c0_117 = arith.constant 0 : index
    %c0_118 = arith.constant 0 : index
    %195 = vector.load %arg8[%c0_117, %c0_118] : memref<1x128xf32, #tpu.memory_space<vmem>>, vector<1x128xf32>
    %196 = arith.mulf %184, %194 : vector<1x128xf32>
    %197 = arith.subf %195, %196 : vector<1x128xf32>
    %198 = vector.broadcast %194 : vector<1x128xf32> to vector<32x128xf32>
    %199 = arith.mulf %167, %198 : vector<32x128xf32>
    %200 = vector.broadcast %197 : vector<1x128xf32> to vector<32x128xf32>
    %201 = arith.addf %199, %200 : vector<32x128xf32>
    %cst_119 = arith.constant 0.000000e+00 : f32
    %202 = vector.broadcast %cst_119 : f32 to vector<32x128xf32>
    %203 = arith.maximumf %201, %202 : vector<32x128xf32>
    %204 = arith.addf %155, %203 : vector<32x128xf32>
    %205 = vector.shape_cast %204 : vector<32x128xf32> to vector<2x16x128xf32>
    %c0_120 = arith.constant 0 : index
    %c8_121 = arith.constant 8 : index
    %c0_122 = arith.constant 0 : index
    %206 = vector.load %arg10[%c0_120, %c8_121, %c0_122] : memref<2x32x128xf32, #tpu.memory_space<vmem>>, vector<2x16x128xf32>
    tpu.vector_store %arg10[%c0_120, %c8_121, %c0_122], %205 {strides = array<i32>} : memref<2x32x128xf32, #tpu.memory_space<vmem>>, vector<2x16x128xf32>,
    %c0_123 = arith.constant 0 : index
    %c7_124 = arith.constant 7 : index
    %c0_125 = arith.constant 0 : index
    %207 = vector.load %arg10[%c0_123, %c7_124, %c0_125] : memref<2x32x128xf32, #tpu.memory_space<vmem>>, vector<2x16x128xf32>
    %208 = vector.shape_cast %207 : vector<2x16x128xf32> to vector<32x128xf32>
    %c0_126 = arith.constant 0 : index
    %c8_127 = arith.constant 8 : index
    %c0_128 = arith.constant 0 : index
    %209 = vector.load %arg10[%c0_126, %c8_127, %c0_128] : memref<2x32x128xf32, #tpu.memory_space<vmem>>, vector<2x16x128xf32>
    %210 = vector.shape_cast %209 : vector<2x16x128xf32> to vector<32x128xf32>
    %c0_129 = arith.constant 0 : index
    %c9_130 = arith.constant 9 : index
    %c0_131 = arith.constant 0 : index
    %211 = vector.load %arg10[%c0_129, %c9_130, %c0_131] : memref<2x32x128xf32, #tpu.memory_space<vmem>>, vector<2x16x128xf32>
    %212 = vector.shape_cast %211 : vector<2x16x128xf32> to vector<32x128xf32>
    %213 = tpu.concatenate %208, %210, %212 in 1 : vector<32x128xf32>, vector<32x128xf32>, vector<32x128xf32> -> vector<32x384xf32>
    %214 = arith.truncf %213 : vector<32x384xf32> to vector<32x384xbf16>
    %c0_132 = arith.constant 0 : index
    %c0_133 = arith.constant 0 : index
    %215 = vector.load %arg6[%c0_132, %c0_133] : memref<384x128xbf16, #tpu.memory_space<vmem>>, vector<384x128xbf16>
    %cst_134 = arith.constant dense<0.000000e+00> : vector<32x128xf32>
    %216 = tpu.matmul %214, %215, %cst_134 {dimension_numbers = #tpu.dot_dimension_numbers<[1], [0], [0], [1], [0, 0, 1, 1], [], []>} : vector<32x384xbf16>, vector<384x128xbf16>, vector<32x128xf32> -> vector<32x128xf32>
    %cst_135 = arith.constant dense<0.000000e+00> : vector<128xf32>
    %217 = vector.multi_reduction <add>, %216, %cst_135 [0] : vector<32x128xf32> to vector<128xf32>
    %218 = vector.shape_cast %217 : vector<128xf32> to vector<1x128xf32>
    %219 = arith.mulf %216, %216 : vector<32x128xf32>
    %cst_136 = arith.constant dense<0.000000e+00> : vector<128xf32>
    %220 = vector.multi_reduction <add>, %219, %cst_136 [0] : vector<32x128xf32> to vector<128xf32>
    %221 = vector.shape_cast %220 : vector<128xf32> to vector<1x128xf32>
    %222 = tpu.concatenate %218, %221 in 0 : vector<1x128xf32>, vector<1x128xf32> -> vector<2x128xf32>
    %c8_i32_137 = arith.constant 8 : i32
    %223 = tpu.dynamic_rotate %222 by %c8_i32_137 dim 1 : vector<2x128xf32>, i32 -> vector<2x128xf32>
    %224 = arith.addf %222, %223 : vector<2x128xf32>
    %c16_i32_138 = arith.constant 16 : i32
    %225 = tpu.dynamic_rotate %224 by %c16_i32_138 dim 1 : vector<2x128xf32>, i32 -> vector<2x128xf32>
    %226 = arith.addf %224, %225 : vector<2x128xf32>
    %c32_i32_139 = arith.constant 32 : i32
    %227 = tpu.dynamic_rotate %226 by %c32_i32_139 dim 1 : vector<2x128xf32>, i32 -> vector<2x128xf32>
    %228 = arith.addf %226, %227 : vector<2x128xf32>
    %c64_i32_140 = arith.constant 64 : i32
    %229 = tpu.dynamic_rotate %228 by %c64_i32_140 dim 1 : vector<2x128xf32>, i32 -> vector<2x128xf32>
    %230 = arith.addf %228, %229 : vector<2x128xf32>
    %cst_141 = arith.constant 0.001953125 : f32
    %231 = vector.broadcast %cst_141 : f32 to vector<2x128xf32>
    %232 = arith.mulf %230, %231 : vector<2x128xf32>
    %233 = vector.extract_strided_slice %232 {offsets = [0, 0], sizes = [1, 128], strides = [1, 1]} : vector<2x128xf32> to vector<1x128xf32>
    %234 = vector.extract_strided_slice %232 {offsets = [1, 0], sizes = [1, 128], strides = [1, 1]} : vector<2x128xf32> to vector<1x128xf32>
    %235 = arith.mulf %233, %233 : vector<1x128xf32>
    %236 = arith.subf %234, %235 : vector<1x128xf32>
    %cst_142 = arith.constant 0.000000e+00 : f32
    %237 = vector.broadcast %cst_142 : f32 to vector<1x128xf32>
    %238 = arith.maximumf %236, %237 : vector<1x128xf32>
    %c0_143 = arith.constant 0 : index
    %c0_144 = arith.constant 0 : index
    %239 = vector.load %arg7[%c0_143, %c0_144] : memref<1x128xf32, #tpu.memory_space<vmem>>, vector<1x128xf32>
    %cst_145 = arith.constant 9.99999974E-6 : f32
    %240 = vector.broadcast %cst_145 : f32 to vector<1x128xf32>
    %241 = arith.addf %238, %240 : vector<1x128xf32>
    %242 = math.rsqrt %241 : vector<1x128xf32>
    %243 = arith.mulf %239, %242 : vector<1x128xf32>
    %c0_146 = arith.constant 0 : index
    %c0_147 = arith.constant 0 : index
    %244 = vector.load %arg8[%c0_146, %c0_147] : memref<1x128xf32, #tpu.memory_space<vmem>>, vector<1x128xf32>
    %245 = arith.mulf %233, %243 : vector<1x128xf32>
    %246 = arith.subf %244, %245 : vector<1x128xf32>
    %247 = vector.broadcast %243 : vector<1x128xf32> to vector<32x128xf32>
    %248 = arith.mulf %216, %247 : vector<32x128xf32>
    %249 = vector.broadcast %246 : vector<1x128xf32> to vector<32x128xf32>
    %250 = arith.addf %248, %249 : vector<32x128xf32>
    %cst_148 = arith.constant 0.000000e+00 : f32
    %251 = vector.broadcast %cst_148 : f32 to vector<32x128xf32>
    %252 = arith.maximumf %250, %251 : vector<32x128xf32>
    %253 = arith.addf %155, %252 : vector<32x128xf32>
    %254 = vector.shape_cast %253 : vector<32x128xf32> to vector<2x16x128xf32>
    %c0_149 = arith.constant 0 : index
    %c8_150 = arith.constant 8 : index
    %c0_151 = arith.constant 0 : index
    %255 = vector.load %arg10[%c0_149, %c8_150, %c0_151] : memref<2x32x128xf32, #tpu.memory_space<vmem>>, vector<2x16x128xf32>
    tpu.vector_store %arg10[%c0_149, %c8_150, %c0_151], %254 {strides = array<i32>} : memref<2x32x128xf32, #tpu.memory_space<vmem>>, vector<2x16x128xf32>,
    %c0_152 = arith.constant 0 : index
    %c7_153 = arith.constant 7 : index
    %c0_154 = arith.constant 0 : index
    %256 = vector.load %arg10[%c0_152, %c7_153, %c0_154] : memref<2x32x128xf32, #tpu.memory_space<vmem>>, vector<2x16x128xf32>
    %257 = vector.shape_cast %256 : vector<2x16x128xf32> to vector<32x128xf32>
    %c0_155 = arith.constant 0 : index
    %c8_156 = arith.constant 8 : index
    %c0_157 = arith.constant 0 : index
    %258 = vector.load %arg10[%c0_155, %c8_156, %c0_157] : memref<2x32x128xf32, #tpu.memory_space<vmem>>, vector<2x16x128xf32>
    %259 = vector.shape_cast %258 : vector<2x16x128xf32> to vector<32x128xf32>
    %c0_158 = arith.constant 0 : index
    %c9_159 = arith.constant 9 : index
    %c0_160 = arith.constant 0 : index
    %260 = vector.load %arg10[%c0_158, %c9_159, %c0_160] : memref<2x32x128xf32, #tpu.memory_space<vmem>>, vector<2x16x128xf32>
    %261 = vector.shape_cast %260 : vector<2x16x128xf32> to vector<32x128xf32>
    %262 = tpu.concatenate %257, %259, %261 in 1 : vector<32x128xf32>, vector<32x128xf32>, vector<32x128xf32> -> vector<32x384xf32>
    %263 = arith.truncf %262 : vector<32x384xf32> to vector<32x384xbf16>
    %c0_161 = arith.constant 0 : index
    %c0_162 = arith.constant 0 : index
    %264 = vector.load %arg6[%c0_161, %c0_162] : memref<384x128xbf16, #tpu.memory_space<vmem>>, vector<384x128xbf16>
    %cst_163 = arith.constant dense<0.000000e+00> : vector<32x128xf32>
    %265 = tpu.matmul %263, %264, %cst_163 {dimension_numbers = #tpu.dot_dimension_numbers<[1], [0], [0], [1], [0, 0, 1, 1], [], []>} : vector<32x384xbf16>, vector<384x128xbf16>, vector<32x128xf32> -> vector<32x128xf32>
    %cst_164 = arith.constant dense<0.000000e+00> : vector<128xf32>
    %266 = vector.multi_reduction <add>, %265, %cst_164 [0] : vector<32x128xf32> to vector<128xf32>
    %267 = vector.shape_cast %266 : vector<128xf32> to vector<1x128xf32>
    %268 = arith.mulf %265, %265 : vector<32x128xf32>
    %cst_165 = arith.constant dense<0.000000e+00> : vector<128xf32>
    %269 = vector.multi_reduction <add>, %268, %cst_165 [0] : vector<32x128xf32> to vector<128xf32>
    %270 = vector.shape_cast %269 : vector<128xf32> to vector<1x128xf32>
    %271 = tpu.concatenate %267, %270 in 0 : vector<1x128xf32>, vector<1x128xf32> -> vector<2x128xf32>
    %c8_i32_166 = arith.constant 8 : i32
    %272 = tpu.dynamic_rotate %271 by %c8_i32_166 dim 1 : vector<2x128xf32>, i32 -> vector<2x128xf32>
    %273 = arith.addf %271, %272 : vector<2x128xf32>
    %c16_i32_167 = arith.constant 16 : i32
    %274 = tpu.dynamic_rotate %273 by %c16_i32_167 dim 1 : vector<2x128xf32>, i32 -> vector<2x128xf32>
    %275 = arith.addf %273, %274 : vector<2x128xf32>
    %c32_i32_168 = arith.constant 32 : i32
    %276 = tpu.dynamic_rotate %275 by %c32_i32_168 dim 1 : vector<2x128xf32>, i32 -> vector<2x128xf32>
    %277 = arith.addf %275, %276 : vector<2x128xf32>
    %c64_i32_169 = arith.constant 64 : i32
    %278 = tpu.dynamic_rotate %277 by %c64_i32_169 dim 1 : vector<2x128xf32>, i32 -> vector<2x128xf32>
    %279 = arith.addf %277, %278 : vector<2x128xf32>
    %cst_170 = arith.constant 0.001953125 : f32
    %280 = vector.broadcast %cst_170 : f32 to vector<2x128xf32>
    %281 = arith.mulf %279, %280 : vector<2x128xf32>
    %282 = vector.extract_strided_slice %281 {offsets = [0, 0], sizes = [1, 128], strides = [1, 1]} : vector<2x128xf32> to vector<1x128xf32>
    %283 = vector.extract_strided_slice %281 {offsets = [1, 0], sizes = [1, 128], strides = [1, 1]} : vector<2x128xf32> to vector<1x128xf32>
    %284 = arith.mulf %282, %282 : vector<1x128xf32>
    %285 = arith.subf %283, %284 : vector<1x128xf32>
    %cst_171 = arith.constant 0.000000e+00 : f32
    %286 = vector.broadcast %cst_171 : f32 to vector<1x128xf32>
    %287 = arith.maximumf %285, %286 : vector<1x128xf32>
    %c0_172 = arith.constant 0 : index
    %c0_173 = arith.constant 0 : index
    %288 = vector.load %arg7[%c0_172, %c0_173] : memref<1x128xf32, #tpu.memory_space<vmem>>, vector<1x128xf32>
    %cst_174 = arith.constant 9.99999974E-6 : f32
    %289 = vector.broadcast %cst_174 : f32 to vector<1x128xf32>
    %290 = arith.addf %287, %289 : vector<1x128xf32>
    %291 = math.rsqrt %290 : vector<1x128xf32>
    %292 = arith.mulf %288, %291 : vector<1x128xf32>
    %c0_175 = arith.constant 0 : index
    %c0_176 = arith.constant 0 : index
    %293 = vector.load %arg8[%c0_175, %c0_176] : memref<1x128xf32, #tpu.memory_space<vmem>>, vector<1x128xf32>
    %294 = arith.mulf %282, %292 : vector<1x128xf32>
    %295 = arith.subf %293, %294 : vector<1x128xf32>
    %296 = vector.broadcast %292 : vector<1x128xf32> to vector<32x128xf32>
    %297 = arith.mulf %265, %296 : vector<32x128xf32>
    %298 = vector.broadcast %295 : vector<1x128xf32> to vector<32x128xf32>
    %299 = arith.addf %297, %298 : vector<32x128xf32>
    %cst_177 = arith.constant 0.000000e+00 : f32
    %300 = vector.broadcast %cst_177 : f32 to vector<32x128xf32>
    %301 = arith.maximumf %299, %300 : vector<32x128xf32>
    %302 = arith.addf %9, %301 : vector<32x128xf32>
    %c0_178 = arith.constant 0 : index
    %c0_179 = arith.constant 0 : index
    %303 = vector.load %arg9[%c0_178, %c0_179] : memref<32x128xf32, #tpu.memory_space<vmem>>, vector<32x128xf32>
    tpu.vector_store %arg9[%c0_178, %c0_179], %302 {strides = array<i32>} : memref<32x128xf32, #tpu.memory_space<vmem>>, vector<32x128xf32>,
    return
  }
}

</mosaic_0001>

<llo_original>
// kernel: rrcnn_block.1
$region0: #{rrcnn_block.1}
  #allocation0 [shape = 'u32[]', space=smem, size = 0x4, offset = 0x4, fixed_abs, tag = 'smem constant byte address 0x4 - core index']
  #allocation1 [shape = 'u32[144,128]{1,0:T(1,128)}', space=vmem, size = 0x12000, scoped, tag = 'internal scratch']
  #allocation2 [shape = 'f32[2,32,128]{2,1,0:T(8,128)}', space=vmem, size = 0x8000, scoped, tag = 'scratch operand']
  %s0 = inlined_call_operand.vmem [shape: f32[32,64], index: 0, kind: input, shape index: {}]
  %s1 = inlined_call_operand.vmem [shape: bf16[64,128], index: 1, kind: input, shape index: {}]
  %s2 = inlined_call_operand.vmem [shape: f32[1,128], index: 2, kind: input, shape index: {}]
  %s3 = inlined_call_operand.vmem [shape: bf16[384,128], index: 3, kind: input, shape index: {}]
  %s4 = inlined_call_operand.vmem [shape: f32[1,128], index: 4, kind: input, shape index: {}]
  %s5 = inlined_call_operand.vmem [shape: f32[1,128], index: 5, kind: input, shape index: {}]
  %s6 = inlined_call_operand.vmem [shape: bf16[384,128], index: 6, kind: input, shape index: {}]
  %s7 = inlined_call_operand.vmem [shape: f32[1,128], index: 7, kind: input, shape index: {}]
  %s8 = inlined_call_operand.vmem [shape: f32[1,128], index: 8, kind: input, shape index: {}]
  %s9 = inlined_call_operand.vmem [shape: f32[32,128], index: 9, kind: output, shape index: {}]
  %s10 = sld [smem:[#allocation0]]
  $region46: #{rrcnn_block.1} parent=0
    _
  %s12 = ssub.s32 1, %s10
  %s13 = scalar_select 0, %s12, %s10
  // Predicated region
  $region2: #{rrcnn_block.1} parent=0 // pred_check
    _
  $region3: #{rrcnn_block.1} parent=0 // pred_check_branch
    %15 = sbr.rel (0) target = $region5
  $region4: #{rrcnn_block.1} parent=0 // pred_region
    _
  $region5: #{rrcnn_block.1} parent=0 // pred_fallthru
    _
  // Predicated region
  $region6: #{rrcnn_block.1} parent=0 // pred_check
    _
  $region7: #{rrcnn_block.1} parent=0 // pred_check_branch
    %17 = sbr.rel (0) target = $region9
  $region8: #{rrcnn_block.1} parent=0 // pred_region
    _
  $region9: #{rrcnn_block.1} parent=0 // pred_fallthru
    _
  // Predicated region
  $region10: #{rrcnn_block.1} parent=0 // pred_check
    _
  $region11: #{rrcnn_block.1} parent=0 // pred_check_branch
    %19 = sbr.rel (0) target = $region13
  $region12: #{rrcnn_block.1} parent=0 // pred_region
    _
  $region13: #{rrcnn_block.1} parent=0 // pred_fallthru
    _
  // Predicated region
  $region14: #{rrcnn_block.1} parent=0 // pred_check
    _
  $region15: #{rrcnn_block.1} parent=0 // pred_check_branch
    %21 = sbr.rel (0) target = $region17
  $region16: #{rrcnn_block.1} parent=0 // pred_region
    _
  $region17: #{rrcnn_block.1} parent=0 // pred_fallthru
    _
  // Predicated region
  $region18: #{rrcnn_block.1} parent=0 // pred_check
    _
  $region19: #{rrcnn_block.1} parent=0 // pred_check_branch
    %23 = sbr.rel (0) target = $region21
  $region20: #{rrcnn_block.1} parent=0 // pred_region
    _
  $region21: #{rrcnn_block.1} parent=0 // pred_fallthru
    _
  // Predicated region
  $region22: #{rrcnn_block.1} parent=0 // pred_check
    _
  $region23: #{rrcnn_block.1} parent=0 // pred_check_branch
    %25 = sbr.rel (0) target = $region25
  $region24: #{rrcnn_block.1} parent=0 // pred_region
    _
  $region25: #{rrcnn_block.1} parent=0 // pred_fallthru
    _
  // Predicated region
  $region26: #{rrcnn_block.1} parent=0 // pred_check
    _
  $region27: #{rrcnn_block.1} parent=0 // pred_check_branch
    %27 = sbr.rel (0) target = $region29
  $region28: #{rrcnn_block.1} parent=0 // pred_region
    _
  $region29: #{rrcnn_block.1} parent=0 // pred_fallthru
    _
  // Predicated region
  $region30: #{rrcnn_block.1} parent=0 // pred_check
    _
  $region31: #{rrcnn_block.1} parent=0 // pred_check_branch
    %29 = sbr.rel (0) target = $region33
  $region32: #{rrcnn_block.1} parent=0 // pred_region
    _
  $region33: #{rrcnn_block.1} parent=0 // pred_fallthru
    _
  // Predicated region
  $region34: #{rrcnn_block.1} parent=0 // pred_check
    _
  $region35: #{rrcnn_block.1} parent=0 // pred_check_branch
    %31 = sbr.rel (0) target = $region37
  $region36: #{rrcnn_block.1} parent=0 // pred_region
    _
  $region37: #{rrcnn_block.1} parent=0 // pred_fallthru
    _
  %33 = vst [vmem:[#allocation2 + $0x7] sm:$0x1] 0.0
  %34 = vst [vmem:[#allocation2 + $0x27] sm:$0x1] 0.0
  %35 = vst [vmem:[#allocation2 + $0x18] sm:$0x1] 0.0
  %36 = vst [vmem:[#allocation2 + $0x38] sm:$0x1] 0.0
  %v37 = vld [vmem:[%s0] sm:$0xff]
  %v38 = vld [vmem:[%s0 + $0x8] sm:$0xff]
  %v39 = vld [vmem:[%s0 + $0x10] sm:$0xff]
  %v40 = vld [vmem:[%s0 + $0x18] sm:$0xff]
  %v41 = vpack.c.bf16 %v38, %v37
  %v42 = vpack.c.bf16 %v40, %v39
  %v43 = vld [vmem:[%s1] sm:$0xf]
  %v44 = vld [vmem:[%s1 + $0x4] sm:$0xf]
  %v45 = vld [vmem:[%s1 + $0x8] sm:$0xf]
  %v46 = vld [vmem:[%s1 + $0xc] sm:$0xf]
  %v47 = vld [vmem:[%s1 + $0x10] sm:$0xf]
  %v48 = vld [vmem:[%s1 + $0x14] sm:$0xf]
  %v49 = vld [vmem:[%s1 + $0x18] sm:$0xf]
  %v50 = vld [vmem:[%s1 + $0x1c] sm:$0xf]
  %v51 = vld [vmem:[%s2] sm:$0x1]
  %v53 = vlaneseq
  %v54 = vshrl.u32 %v53, 7
  %v55 = vsub.s32 0, %v54
  %v56 = vrot.slane %v51, %v55
  %v66 = vunpack.c.l.b16 %v43
  %v67 = vunpack.c.l.b16 %v44
  %v68 = vunpack.c.l.b16 %v45
  %v69 = vunpack.c.l.b16 %v46
  %v70 = vunpack.c.l.b16 %v47
  %v71 = vunpack.c.l.b16 %v48
  %v72 = vunpack.c.l.b16 %v49
  %v73 = vunpack.c.l.b16 %v50
  %v74 = vpack.c.b16 %v67, %v66
  %v75 = vpack.c.b16 %v69, %v68
  %v76 = vpack.c.b16 %v71, %v70
  %v77 = vpack.c.b16 %v73, %v72
  %vm82 = vcmask 523264
  %v84 = vsel %vm82, %v41, 0
  %v87 = vsel %vm82, %v42, 0
  %89 = vmatprep.subr.bf16.mxu0 0
  %90 = vmatpush1.bf16.msra.mxu0 %v74
  %91 = vmatprep.subr.bf16.mxu0 0
  %92 = vmatpush1.bf16.msra.mxu0 %v75
  %93 = vmatprep.subr.bf16.mxu0 0
  %94 = vmatpush1.bf16.msra.mxu0 %v76
  %95 = vmatprep.subr.bf16.mxu0 0
  %96 = vmatpush1.bf16.msra.mxu0 %v77
  %97 = vmatprep.subr.bf16.mxu0 0
  %98 = vmatpush1.bf16.msra.mxu0 0
  %99 = vmatprep.subr.bf16.mxu0 0
  %100 = vmatpush1.bf16.msra.mxu0 0
  %101 = vmatprep.subr.bf16.mxu0 0
  %102 = vmatpush1.bf16.msra.mxu0 0
  %103 = vmatprep.subr.bf16.mxu0 0
  %104 = vmatpush1.bf16.msra.mxu0 0
  %105 = vmatprep.subr.bf16.mxu0 0
  %106 = vmatpush1.bf16.msra.mxu0 0
  %107 = vmatprep.subr.bf16.mxu0 0
  %108 = vmatpush1.bf16.msra.mxu0 0
  %109 = vmatprep.subr.bf16.mxu0 0
  %110 = vmatpush1.bf16.msra.mxu0 0
  %111 = vmatprep.subr.bf16.mxu0 0
  %112 = vmatpush1.bf16.msra.mxu0 0
  %113 = vmatprep.subr.bf16.mxu0 0
  %114 = vmatpush1.bf16.msra.mxu0 0
  %115 = vmatprep.subr.bf16.mxu0 0
  %116 = vmatpush1.bf16.msra.mxu0 0
  %117 = vmatprep.subr.bf16.mxu0 0
  %118 = vmatpush1.bf16.msra.mxu0 0
  %119 = vmatprep.subr.bf16.mxu0 0
  %120 = vmatpush1.bf16.msra.mxu0 0
  %121 = vmatprep.mubr.bf16.mxu0 0
  %122 = vmatmul.mubr.bf16.gmra.mrb[0].mxu0 %v84
  %v123 = vpop.f32.mrb[0].mxu0
  %v124 = vadd.f32 %v56, %v123
  %v125 = vpop.f32.mrb[0].mxu0
  %v126 = vpop.f32.mrb[0].mxu0
  %v127 = vadd.f32 %v56, %v126
  %v128 = vpop.f32.mrb[0].mxu0
  %129 = vmatprep.mubr.bf16.mxu0 0
  %130 = vmatmul.mubr.bf16.gmra.mrb[0].mxu0 %v87
  %v131 = vpop.f32.mrb[0].mxu0
  %v132 = vadd.f32 %v56, %v131
  %v133 = vpop.f32.mrb[0].mxu0
  %v134 = vpop.f32.mrb[0].mxu0
  %v135 = vadd.f32 %v56, %v134
  %v136 = vpop.f32.mrb[0].mxu0
  %137 = vdwg.mxu0
  %138 = vst [vmem:[#allocation2 + $0x8] sm:$0xff] %v124
  %139 = vst [vmem:[#allocation2 + $0x10] sm:$0xff] %v127
  %140 = vst [vmem:[#allocation2 + $0x28] sm:$0xff] %v132
  %141 = vst [vmem:[#allocation2 + $0x30] sm:$0xff] %v135
  %v142 = vld [vmem:[#allocation2 + $0x7] sm:$0xff]
  %v143 = vld [vmem:[#allocation2 + $0xf] sm:$0xff]
  %v144 = vld [vmem:[#allocation2 + $0x27] sm:$0xff]
  %v145 = vld [vmem:[#allocation2 + $0x2f] sm:$0xff]
  %v146 = vld [vmem:[#allocation2 + $0x8] sm:$0xff]
  %v147 = vld [vmem:[#allocation2 + $0x10] sm:$0xff]
  %v148 = vld [vmem:[#allocation2 + $0x28] sm:$0xff]
  %v149 = vld [vmem:[#allocation2 + $0x30] sm:$0xff]
  %v150 = vld [vmem:[#allocation2 + $0x9] sm:$0xff]
  %v151 = vld [vmem:[#allocation2 + $0x11] sm:$0xff]
  %v152 = vld [vmem:[#allocation2 + $0x29] sm:$0xff]
  %v153 = vld [vmem:[#allocation2 + $0x31] sm:$0xff]
  %v154 = vpack.c.bf16 %v143, %v142
  %v155 = vpack.c.bf16 %v147, %v146
  %v156 = vpack.c.bf16 %v151, %v150
  %v157 = vpack.c.bf16 %v145, %v144
  %v158 = vpack.c.bf16 %v149, %v148
  %v159 = vpack.c.bf16 %v153, %v152
  %v160 = vld [vmem:[%s3] sm:$0xf]
  %v161 = vld [vmem:[%s3 + $0x4] sm:$0xf]
  %v162 = vld [vmem:[%s3 + $0x8] sm:$0xf]
  %v163 = vld [vmem:[%s3 + $0xc] sm:$0xf]
  %v164 = vld [vmem:[%s3 + $0x10] sm:$0xf]
  %v165 = vld [vmem:[%s3 + $0x14] sm:$0xf]
  %v166 = vld [vmem:[%s3 + $0x18] sm:$0xf]
  %v167 = vld [vmem:[%s3 + $0x1c] sm:$0xf]
  %v168 = vld [vmem:[%s3 + $0x20] sm:$0xf]
  %v169 = vld [vmem:[%s3 + $0x24] sm:$0xf]
  %v170 = vld [vmem:[%s3 + $0x28] sm:$0xf]
  %v171 = vld [vmem:[%s3 + $0x2c] sm:$0xf]
  %v172 = vld [vmem:[%s3 + $0x30] sm:$0xf]
  %v173 = vld [vmem:[%s3 + $0x34] sm:$0xf]
  %v174 = vld [vmem:[%s3 + $0x38] sm:$0xf]
  %v175 = vld [vmem:[%s3 + $0x3c] sm:$0xf]
  %v176 = vld [vmem:[%s3 + $0x40] sm:$0xf]
  %v177 = vld [vmem:[%s3 + $0x44] sm:$0xf]
  %v178 = vld [vmem:[%s3 + $0x48] sm:$0xf]
  %v179 = vld [vmem:[%s3 + $0x4c] sm:$0xf]
  %v180 = vld [vmem:[%s3 + $0x50] sm:$0xf]
  %v181 = vld [vmem:[%s3 + $0x54] sm:$0xf]
  %v182 = vld [vmem:[%s3 + $0x58] sm:$0xf]
  %v183 = vld [vmem:[%s3 + $0x5c] sm:$0xf]
  %v184 = vld [vmem:[%s3 + $0x60] sm:$0xf]
  %v185 = vld [vmem:[%s3 + $0x64] sm:$0xf]
  %v186 = vld [vmem:[%s3 + $0x68] sm:$0xf]
  %v187 = vld [vmem:[%s3 + $0x6c] sm:$0xf]
  %v188 = vld [vmem:[%s3 + $0x70] sm:$0xf]
  %v189 = vld [vmem:[%s3 + $0x74] sm:$0xf]
  %v190 = vld [vmem:[%s3 + $0x78] sm:$0xf]
  %v191 = vld [vmem:[%s3 + $0x7c] sm:$0xf]
  %v192 = vld [vmem:[%s3 + $0x80] sm:$0xf]
  %v193 = vld [vmem:[%s3 + $0x84] sm:$0xf]
  %v194 = vld [vmem:[%s3 + $0x88] sm:$0xf]
  %v195 = vld [vmem:[%s3 + $0x8c] sm:$0xf]
  %v196 = vld [vmem:[%s3 + $0x90] sm:$0xf]
  %v197 = vld [vmem:[%s3 + $0x94] sm:$0xf]
  %v198 = vld [vmem:[%s3 + $0x98] sm:$0xf]
  %v199 = vld [vmem:[%s3 + $0x9c] sm:$0xf]
  %v200 = vld [vmem:[%s3 + $0xa0] sm:$0xf]
  %v201 = vld [vmem:[%s3 + $0xa4] sm:$0xf]
  %v202 = vld [vmem:[%s3 + $0xa8] sm:$0xf]
  %v203 = vld [vmem:[%s3 + $0xac] sm:$0xf]
  %v204 = vld [vmem:[%s3 + $0xb0] sm:$0xf]
  %v205 = vld [vmem:[%s3 + $0xb4] sm:$0xf]
  %v206 = vld [vmem:[%s3 + $0xb8] sm:$0xf]
  %v207 = vld [vmem:[%s3 + $0xbc] sm:$0xf]
  %v256 = vunpack.c.l.b16 %v160
  %v257 = vunpack.c.l.b16 %v161
  %v258 = vunpack.c.l.b16 %v162
  %v259 = vunpack.c.l.b16 %v163
  %v260 = vunpack.c.l.b16 %v164
  %v261 = vunpack.c.l.b16 %v165
  %v262 = vunpack.c.l.b16 %v166
  %v263 = vunpack.c.l.b16 %v167
  %v264 = vunpack.c.l.b16 %v168
  %v265 = vunpack.c.l.b16 %v169
  %v266 = vunpack.c.l.b16 %v170
  %v267 = vunpack.c.l.b16 %v171
  %v268 = vunpack.c.l.b16 %v172
  %v269 = vunpack.c.l.b16 %v173
  %v270 = vunpack.c.l.b16 %v174
  %v271 = vunpack.c.l.b16 %v175
  %v272 = vunpack.c.l.b16 %v176
  %v273 = vunpack.c.l.b16 %v177
  %v274 = vunpack.c.l.b16 %v178
  %v275 = vunpack.c.l.b16 %v179
  %v276 = vunpack.c.l.b16 %v180
  %v277 = vunpack.c.l.b16 %v181
  %v278 = vunpack.c.l.b16 %v182
  %v279 = vunpack.c.l.b16 %v183
  %v280 = vunpack.c.l.b16 %v184
  %v281 = vunpack.c.l.b16 %v185
  %v282 = vunpack.c.l.b16 %v186
  %v283 = vunpack.c.l.b16 %v187
  %v284 = vunpack.c.l.b16 %v188
  %v285 = vunpack.c.l.b16 %v189
  %v286 = vunpack.c.l.b16 %v190
  %v287 = vunpack.c.l.b16 %v191
  %v288 = vunpack.c.l.b16 %v192
  %v289 = vunpack.c.l.b16 %v193
  %v290 = vunpack.c.l.b16 %v194
  %v291 = vunpack.c.l.b16 %v195
  %v292 = vunpack.c.l.b16 %v196
  %v293 = vunpack.c.l.b16 %v197
  %v294 = vunpack.c.l.b16 %v198
  %v295 = vunpack.c.l.b16 %v199
  %v296 = vunpack.c.l.b16 %v200
  %v297 = vunpack.c.l.b16 %v201
  %v298 = vunpack.c.l.b16 %v202
  %v299 = vunpack.c.l.b16 %v203
  %v300 = vunpack.c.l.b16 %v204
  %v301 = vunpack.c.l.b16 %v205
  %v302 = vunpack.c.l.b16 %v206
  %v303 = vunpack.c.l.b16 %v207
  %v304 = vpack.c.b16 %v257, %v256
  %v305 = vpack.c.b16 %v259, %v258
  %v306 = vpack.c.b16 %v261, %v260
  %v307 = vpack.c.b16 %v263, %v262
  %v308 = vpack.c.b16 %v265, %v264
  %v309 = vpack.c.b16 %v267, %v266
  %v310 = vpack.c.b16 %v269, %v268
  %v311 = vpack.c.b16 %v271, %v270
  %v312 = vpack.c.b16 %v273, %v272
  %v313 = vpack.c.b16 %v275, %v274
  %v314 = vpack.c.b16 %v277, %v276
  %v315 = vpack.c.b16 %v279, %v278
  %v316 = vpack.c.b16 %v281, %v280
  %v317 = vpack.c.b16 %v283, %v282
  %v318 = vpack.c.b16 %v285, %v284
  %v319 = vpack.c.b16 %v287, %v286
  %v320 = vpack.c.b16 %v289, %v288
  %v321 = vpack.c.b16 %v291, %v290
  %v322 = vpack.c.b16 %v293, %v292
  %v323 = vpack.c.b16 %v295, %v294
  %v324 = vpack.c.b16 %v297, %v296
  %v325 = vpack.c.b16 %v299, %v298
  %v326 = vpack.c.b16 %v301, %v300
  %v327 = vpack.c.b16 %v303, %v302
  %352 = vmatprep.subr.bf16.mxu0 0
  %353 = vmatpush1.bf16.msra.mxu0 %v304
  %354 = vmatprep.subr.bf16.mxu0 0
  %355 = vmatpush1.bf16.msra.mxu0 %v305
  %356 = vmatprep.subr.bf16.mxu0 0
  %357 = vmatpush1.bf16.msra.mxu0 %v306
  %358 = vmatprep.subr.bf16.mxu0 0
  %359 = vmatpush1.bf16.msra.mxu0 %v307
  %360 = vmatprep.subr.bf16.mxu0 0
  %361 = vmatpush1.bf16.msra.mxu0 %v308
  %362 = vmatprep.subr.bf16.mxu0 0
  %363 = vmatpush1.bf16.msra.mxu0 %v309
  %364 = vmatprep.subr.bf16.mxu0 0
  %365 = vmatpush1.bf16.msra.mxu0 %v310
  %366 = vmatprep.subr.bf16.mxu0 0
  %367 = vmatpush1.bf16.msra.mxu0 %v311
  %368 = vmatprep.subr.bf16.mxu0 0
  %369 = vmatpush1.bf16.msra.mxu0 %v312
  %370 = vmatprep.subr.bf16.mxu0 0
  %371 = vmatpush1.bf16.msra.mxu0 %v313
  %372 = vmatprep.subr.bf16.mxu0 0
  %373 = vmatpush1.bf16.msra.mxu0 %v314
  %374 = vmatprep.subr.bf16.mxu0 0
  %375 = vmatpush1.bf16.msra.mxu0 %v315
  %376 = vmatprep.subr.bf16.mxu0 0
  %377 = vmatpush1.bf16.msra.mxu0 %v316
  %378 = vmatprep.subr.bf16.mxu0 0
  %379 = vmatpush1.bf16.msra.mxu0 %v317
  %380 = vmatprep.subr.bf16.mxu0 0
  %381 = vmatpush1.bf16.msra.mxu0 %v318
  %382 = vmatprep.subr.bf16.mxu0 0
  %383 = vmatpush1.bf16.msra.mxu0 %v319
  %384 = vmatprep.mubr.bf16.mxu0 %v155
  %385 = vmatmul.mubr.bf16.gmra.mrb[0].mxu0 %v154
  %v386 = vpop.f32.mrb[0].mxu0
  %v387 = vadd.f32 0.0, %v386
  %v388 = vpop.f32.mrb[0].mxu0
  %v389 = vpop.f32.mrb[0].mxu0
  %v390 = vadd.f32 0.0, %v389
  %v391 = vpop.f32.mrb[0].mxu0
  %392 = vmatprep.mubr.bf16.mxu0 %v158
  %393 = vmatmul.mubr.bf16.gmra.mrb[0].mxu0 %v157
  %v394 = vpop.f32.mrb[0].mxu0
  %v395 = vadd.f32 0.0, %v394
  %v396 = vpop.f32.mrb[0].mxu0
  %v397 = vpop.f32.mrb[0].mxu0
  %v398 = vadd.f32 0.0, %v397
  %v399 = vpop.f32.mrb[0].mxu0
  %400 = vdwg.mxu0
  %401 = vmatprep.subr.bf16.mxu0 0
  %402 = vmatpush1.bf16.msra.mxu0 %v320
  %403 = vmatprep.subr.bf16.mxu0 0
  %404 = vmatpush1.bf16.msra.mxu0 %v321
  %405 = vmatprep.subr.bf16.mxu0 0
  %406 = vmatpush1.bf16.msra.mxu0 %v322
  %407 = vmatprep.subr.bf16.mxu0 0
  %408 = vmatpush1.bf16.msra.mxu0 %v323
  %409 = vmatprep.subr.bf16.mxu0 0
  %410 = vmatpush1.bf16.msra.mxu0 %v324
  %411 = vmatprep.subr.bf16.mxu0 0
  %412 = vmatpush1.bf16.msra.mxu0 %v325
  %413 = vmatprep.subr.bf16.mxu0 0
  %414 = vmatpush1.bf16.msra.mxu0 %v326
  %415 = vmatprep.subr.bf16.mxu0 0
  %416 = vmatpush1.bf16.msra.mxu0 %v327
  %417 = vmatprep.subr.bf16.mxu0 0
  %418 = vmatpush1.bf16.msra.mxu0 0
  %419 = vmatprep.subr.bf16.mxu0 0
  %420 = vmatpush1.bf16.msra.mxu0 0
  %421 = vmatprep.subr.bf16.mxu0 0
  %422 = vmatpush1.bf16.msra.mxu0 0
  %423 = vmatprep.subr.bf16.mxu0 0
  %424 = vmatpush1.bf16.msra.mxu0 0
  %425 = vmatprep.subr.bf16.mxu0 0
  %426 = vmatpush1.bf16.msra.mxu0 0
  %427 = vmatprep.subr.bf16.mxu0 0
  %428 = vmatpush1.bf16.msra.mxu0 0
  %429 = vmatprep.subr.bf16.mxu0 0
  %430 = vmatpush1.bf16.msra.mxu0 0
  %431 = vmatprep.subr.bf16.mxu0 0
  %432 = vmatpush1.bf16.msra.mxu0 0
  %433 = vmatprep.mubr.bf16.mxu0 0
  %434 = vmatmul.mubr.bf16.gmra.mrb[0].mxu0 %v156
  %v435 = vpop.f32.mrb[0].mxu0
  %v436 = vadd.f32 %v387, %v435
  %v437 = vpop.f32.mrb[0].mxu0
  %v438 = vpop.f32.mrb[0].mxu0
  %v439 = vadd.f32 %v390, %v438
  %v440 = vpop.f32.mrb[0].mxu0
  %441 = vmatprep.mubr.bf16.mxu0 0
  %442 = vmatmul.mubr.bf16.gmra.mrb[0].mxu0 %v159
  %v443 = vpop.f32.mrb[0].mxu0
  %v444 = vadd.f32 %v395, %v443
  %v445 = vpop.f32.mrb[0].mxu0
  %v446 = vpop.f32.mrb[0].mxu0
  %v447 = vadd.f32 %v398, %v446
  %v448 = vpop.f32.mrb[0].mxu0
  %449 = vdwg.mxu0
  %v450 = vadd.f32 %v436, %v439
  %v451 = vadd.f32 %v450, %v444
  %v452 = vadd.f32 %v451, %v447
  %v453 = vrot.slane %v452, 4
  %v454 = vadd.f32 %v452, %v453
  %v455 = vrot.slane %v454, 2
  %v456 = vadd.f32 %v454, %v455
  %v457 = vrot.slane %v456, 1
  %v458 = vadd.f32 %v456, %v457
  %v459 = vmul.f32 %v436, %v436
  %v460 = vmul.f32 %v439, %v439
  %v461 = vmul.f32 %v444, %v444
  %v462 = vmul.f32 %v447, %v447
  %v463 = vadd.f32 %v459, %v460
  %v464 = vadd.f32 %v463, %v461
  %v465 = vadd.f32 %v464, %v462
  %v466 = vrot.slane %v465, 4
  %v467 = vadd.f32 %v465, %v466
  %v468 = vrot.slane %v467, 2
  %v469 = vadd.f32 %v467, %v468
  %v470 = vrot.slane %v469, 1
  %v471 = vadd.f32 %v469, %v470
  %vm472 = vcmask 1040384
  %v473 = vsel %vm472, %v458, %v471
  %474 = vrot.lane.b32.xlu0 %v473, 8
  %v475 = vpop.permute.xlu0 %474
  %v476 = vadd.f32 %v473, %v475
  %477 = vrot.lane.b32.xlu0 %v476, 16
  %v478 = vpop.permute.xlu0 %477
  %v479 = vadd.f32 %v476, %v478
  %480 = vrot.lane.b32.xlu0 %v479, 32
  %v481 = vpop.permute.xlu0 %480
  %v482 = vadd.f32 %v479, %v481
  %483 = vrot.lane.b32.xlu0 %v482, 64
  %v484 = vpop.permute.xlu0 %483
  %v485 = vadd.f32 %v482, %v484
  %v486 = vmul.f32 %v485, 0.001953125
  %v487 = vmul.f32 %v486, %v486
  %v489 = vrot.slane %v487, 7
  %v491 = vsub.f32 %v486, %v489
  %v492 = vmax.f32 %v491, 0.0
  %v493 = vld [vmem:[%s4] sm:$0x1]
  %v494 = vadd.f32 %v492, 1e-05
  %v495 = vrsqrt.pop %v494
  %v498 = vunpack.c.l.s4 1966171168
  %v499 = vunpack.c.0.s8 %v498
  %v500 = vlaneseq
  %v501 = vshrl.u32 %v500, 7
  %v502 = vsub.s32 %v499, %v501
  %v503 = vrot.slane %v495, %v502
  %v504 = vcombine.high %v503, %v503
  %v506 = vunpack.c.l.s4 1966171168
  %v507 = vunpack.c.0.s8 %v506
  %v508 = vlaneseq
  %v509 = vshrl.u32 %v508, 7
  %v510 = vsub.s32 %v507, %v509
  %v511 = vrot.slane %v504, %v510
  %v513 = vmul.f32 %v493, %v511
  %v514 = vld [vmem:[%s5] sm:$0x1]
  %v515 = vmul.f32 %v486, %v513
  %v516 = vsub.f32 %v514, %v515
  %v518 = vlaneseq
  %v519 = vshrl.u32 %v518, 7
  %v520 = vsub.s32 0, %v519
  %v521 = vrot.slane %v513, %v520
  %v523 = vmul.f32 %v436, %v521
  %v524 = vmul.f32 %v439, %v521
  %v525 = vmul.f32 %v444, %v521
  %v526 = vmul.f32 %v447, %v521
  %v528 = vlaneseq
  %v529 = vshrl.u32 %v528, 7
  %v530 = vsub.s32 0, %v529
  %v531 = vrot.slane %v516, %v530
  %v533 = vadd.f32 %v523, %v531
  %v534 = vadd.f32 %v524, %v531
  %v535 = vadd.f32 %v525, %v531
  %v536 = vadd.f32 %v526, %v531
  %v537 = vmax.f32 %v533, 0.0
  %v538 = vmax.f32 %v534, 0.0
  %v539 = vmax.f32 %v535, 0.0
  %v540 = vmax.f32 %v536, 0.0
  %v541 = vadd.f32 %v124, %v537
  %v542 = vadd.f32 %v127, %v538
  %v543 = vadd.f32 %v132, %v539
  %v544 = vadd.f32 %v135, %v540
  %545 = vst [vmem:[#allocation2 + $0x8] sm:$0xff] %v541
  %546 = vst [vmem:[#allocation2 + $0x10] sm:$0xff] %v542
  %547 = vst [vmem:[#allocation2 + $0x28] sm:$0xff] %v543
  %548 = vst [vmem:[#allocation2 + $0x30] sm:$0xff] %v544
  %v549 = vld [vmem:[#allocation2 + $0x7] sm:$0xff]
  %v550 = vld [vmem:[#allocation2 + $0xf] sm:$0xff]
  %v551 = vld [vmem:[#allocation2 + $0x27] sm:$0xff]
  %v552 = vld [vmem:[#allocation2 + $0x2f] sm:$0xff]
  %v553 = vld [vmem:[#allocation2 + $0x8] sm:$0xff]
  %v554 = vld [vmem:[#allocation2 + $0x10] sm:$0xff]
  %v555 = vld [vmem:[#allocation2 + $0x28] sm:$0xff]
  %v556 = vld [vmem:[#allocation2 + $0x30] sm:$0xff]
  %v557 = vld [vmem:[#allocation2 + $0x9] sm:$0xff]
  %v558 = vld [vmem:[#allocation2 + $0x11] sm:$0xff]
  %v559 = vld [vmem:[#allocation2 + $0x29] sm:$0xff]
  %v560 = vld [vmem:[#allocation2 + $0x31] sm:$0xff]
  %v561 = vpack.c.bf16 %v550, %v549
  %v562 = vpack.c.bf16 %v554, %v553
  %v563 = vpack.c.bf16 %v558, %v557
  %v564 = vpack.c.bf16 %v552, %v551
  %v565 = vpack.c.bf16 %v556, %v555
  %v566 = vpack.c.bf16 %v560, %v559
  %v567 = vld [vmem:[%s3] sm:$0xf]
  %v568 = vld [vmem:[%s3 + $0x4] sm:$0xf]
  %v569 = vld [vmem:[%s3 + $0x8] sm:$0xf]
  %v570 = vld [vmem:[%s3 + $0xc] sm:$0xf]
  %v571 = vld [vmem:[%s3 + $0x10] sm:$0xf]
  %v572 = vld [vmem:[%s3 + $0x14] sm:$0xf]
  %v573 = vld [vmem:[%s3 + $0x18] sm:$0xf]
  %v574 = vld [vmem:[%s3 + $0x1c] sm:$0xf]
  %v575 = vld [vmem:[%s3 + $0x20] sm:$0xf]
  %v576 = vld [vmem:[%s3 + $0x24] sm:$0xf]
  %v577 = vld [vmem:[%s3 + $0x28] sm:$0xf]
  %v578 = vld [vmem:[%s3 + $0x2c] sm:$0xf]
  %v579 = vld [vmem:[%s3 + $0x30] sm:$0xf]
  %v580 = vld [vmem:[%s3 + $0x34] sm:$0xf]
  %v581 = vld [vmem:[%s3 + $0x38] sm:$0xf]
  %v582 = vld [vmem:[%s3 + $0x3c] sm:$0xf]
  %v583 = vld [vmem:[%s3 + $0x40] sm:$0xf]
  %v584 = vld [vmem:[%s3 + $0x44] sm:$0xf]
  %v585 = vld [vmem:[%s3 + $0x48] sm:$0xf]
  %v586 = vld [vmem:[%s3 + $0x4c] sm:$0xf]
  %v587 = vld [vmem:[%s3 + $0x50] sm:$0xf]
  %v588 = vld [vmem:[%s3 + $0x54] sm:$0xf]
  %v589 = vld [vmem:[%s3 + $0x58] sm:$0xf]
  %v590 = vld [vmem:[%s3 + $0x5c] sm:$0xf]
  %v591 = vld [vmem:[%s3 + $0x60] sm:$0xf]
  %v592 = vld [vmem:[%s3 + $0x64] sm:$0xf]
  %v593 = vld [vmem:[%s3 + $0x68] sm:$0xf]
  %v594 = vld [vmem:[%s3 + $0x6c] sm:$0xf]
  %v595 = vld [vmem:[%s3 + $0x70] sm:$0xf]
  %v596 = vld [vmem:[%s3 + $0x74] sm:$0xf]
  %v597 = vld [vmem:[%s3 + $0x78] sm:$0xf]
  %v598 = vld [vmem:[%s3 + $0x7c] sm:$0xf]
  %v599 = vld [vmem:[%s3 + $0x80] sm:$0xf]
  %v600 = vld [vmem:[%s3 + $0x84] sm:$0xf]
  %v601 = vld [vmem:[%s3 + $0x88] sm:$0xf]
  %v602 = vld [vmem:[%s3 + $0x8c] sm:$0xf]
  %v603 = vld [vmem:[%s3 + $0x90] sm:$0xf]
  %v604 = vld [vmem:[%s3 + $0x94] sm:$0xf]
  %v605 = vld [vmem:[%s3 + $0x98] sm:$0xf]
  %v606 = vld [vmem:[%s3 + $0x9c] sm:$0xf]
  %v607 = vld [vmem:[%s3 + $0xa0] sm:$0xf]
  %v608 = vld [vmem:[%s3 + $0xa4] sm:$0xf]
  %v609 = vld [vmem:[%s3 + $0xa8] sm:$0xf]
  %v610 = vld [vmem:[%s3 + $0xac] sm:$0xf]
  %v611 = vld [vmem:[%s3 + $0xb0] sm:$0xf]
  %v612 = vld [vmem:[%s3 + $0xb4] sm:$0xf]
  %v613 = vld [vmem:[%s3 + $0xb8] sm:$0xf]
  %v614 = vld [vmem:[%s3 + $0xbc] sm:$0xf]
  %v663 = vunpack.c.l.b16 %v567
  %v664 = vunpack.c.l.b16 %v568
  %v665 = vunpack.c.l.b16 %v569
  %v666 = vunpack.c.l.b16 %v570
  %v667 = vunpack.c.l.b16 %v571
  %v668 = vunpack.c.l.b16 %v572
  %v669 = vunpack.c.l.b16 %v573
  %v670 = vunpack.c.l.b16 %v574
  %v671 = vunpack.c.l.b16 %v575
  %v672 = vunpack.c.l.b16 %v576
  %v673 = vunpack.c.l.b16 %v577
  %v674 = vunpack.c.l.b16 %v578
  %v675 = vunpack.c.l.b16 %v579
  %v676 = vunpack.c.l.b16 %v580
  %v677 = vunpack.c.l.b16 %v581
  %v678 = vunpack.c.l.b16 %v582
  %v679 = vunpack.c.l.b16 %v583
  %v680 = vunpack.c.l.b16 %v584
  %v681 = vunpack.c.l.b16 %v585
  %v682 = vunpack.c.l.b16 %v586
  %v683 = vunpack.c.l.b16 %v587
  %v684 = vunpack.c.l.b16 %v588
  %v685 = vunpack.c.l.b16 %v589
  %v686 = vunpack.c.l.b16 %v590
  %v687 = vunpack.c.l.b16 %v591
  %v688 = vunpack.c.l.b16 %v592
  %v689 = vunpack.c.l.b16 %v593
  %v690 = vunpack.c.l.b16 %v594
  %v691 = vunpack.c.l.b16 %v595
  %v692 = vunpack.c.l.b16 %v596
  %v693 = vunpack.c.l.b16 %v597
  %v694 = vunpack.c.l.b16 %v598
  %v695 = vunpack.c.l.b16 %v599
  %v696 = vunpack.c.l.b16 %v600
  %v697 = vunpack.c.l.b16 %v601
  %v698 = vunpack.c.l.b16 %v602
  %v699 = vunpack.c.l.b16 %v603
  %v700 = vunpack.c.l.b16 %v604
  %v701 = vunpack.c.l.b16 %v605
  %v702 = vunpack.c.l.b16 %v606
  %v703 = vunpack.c.l.b16 %v607
  %v704 = vunpack.c.l.b16 %v608
  %v705 = vunpack.c.l.b16 %v609
  %v706 = vunpack.c.l.b16 %v610
  %v707 = vunpack.c.l.b16 %v611
  %v708 = vunpack.c.l.b16 %v612
  %v709 = vunpack.c.l.b16 %v613
  %v710 = vunpack.c.l.b16 %v614
  %v711 = vpack.c.b16 %v664, %v663
  %v712 = vpack.c.b16 %v666, %v665
  %v713 = vpack.c.b16 %v668, %v667
  %v714 = vpack.c.b16 %v670, %v669
  %v715 = vpack.c.b16 %v672, %v671
  %v716 = vpack.c.b16 %v674, %v673
  %v717 = vpack.c.b16 %v676, %v675
  %v718 = vpack.c.b16 %v678, %v677
  %v719 = vpack.c.b16 %v680, %v679
  %v720 = vpack.c.b16 %v682, %v681
  %v721 = vpack.c.b16 %v684, %v683
  %v722 = vpack.c.b16 %v686, %v685
  %v723 = vpack.c.b16 %v688, %v687
  %v724 = vpack.c.b16 %v690, %v689
  %v725 = vpack.c.b16 %v692, %v691
  %v726 = vpack.c.b16 %v694, %v693
  %v727 = vpack.c.b16 %v696, %v695
  %v728 = vpack.c.b16 %v698, %v697
  %v729 = vpack.c.b16 %v700, %v699
  %v730 = vpack.c.b16 %v702, %v701
  %v731 = vpack.c.b16 %v704, %v703
  %v732 = vpack.c.b16 %v706, %v705
  %v733 = vpack.c.b16 %v708, %v707
  %v734 = vpack.c.b16 %v710, %v709
  %759 = vmatprep.subr.bf16.mxu0 0
  %760 = vmatpush1.bf16.msra.mxu0 %v711
  %761 = vmatprep.subr.bf16.mxu0 0
  %762 = vmatpush1.bf16.msra.mxu0 %v712
  %763 = vmatprep.subr.bf16.mxu0 0
  %764 = vmatpush1.bf16.msra.mxu0 %v713
  %765 = vmatprep.subr.bf16.mxu0 0
  %766 = vmatpush1.bf16.msra.mxu0 %v714
  %767 = vmatprep.subr.bf16.mxu0 0
  %768 = vmatpush1.bf16.msra.mxu0 %v715
  %769 = vmatprep.subr.bf16.mxu0 0
  %770 = vmatpush1.bf16.msra.mxu0 %v716
  %771 = vmatprep.subr.bf16.mxu0 0
  %772 = vmatpush1.bf16.msra.mxu0 %v717
  %773 = vmatprep.subr.bf16.mxu0 0
  %774 = vmatpush1.bf16.msra.mxu0 %v718
  %775 = vmatprep.subr.bf16.mxu0 0
  %776 = vmatpush1.bf16.msra.mxu0 %v719
  %777 = vmatprep.subr.bf16.mxu0 0
  %778 = vmatpush1.bf16.msra.mxu0 %v720
  %779 = vmatprep.subr.bf16.mxu0 0
  %780 = vmatpush1.bf16.msra.mxu0 %v721
  %781 = vmatprep.subr.bf16.mxu0 0
  %782 = vmatpush1.bf16.msra.mxu0 %v722
  %783 = vmatprep.subr.bf16.mxu0 0
  %784 = vmatpush1.bf16.msra.mxu0 %v723
  %785 = vmatprep.subr.bf16.mxu0 0
  %786 = vmatpush1.bf16.msra.mxu0 %v724
  %787 = vmatprep.subr.bf16.mxu0 0
  %788 = vmatpush1.bf16.msra.mxu0 %v725
  %789 = vmatprep.subr.bf16.mxu0 0
  %790 = vmatpush1.bf16.msra.mxu0 %v726
  %791 = vmatprep.mubr.bf16.mxu0 %v562
  %792 = vmatmul.mubr.bf16.gmra.mrb[0].mxu0 %v561
  %v793 = vpop.f32.mrb[0].mxu0
  %v794 = vadd.f32 0.0, %v793
  %v795 = vpop.f32.mrb[0].mxu0
  %v796 = vpop.f32.mrb[0].mxu0
  %v797 = vadd.f32 0.0, %v796
  %v798 = vpop.f32.mrb[0].mxu0
  %799 = vmatprep.mubr.bf16.mxu0 %v565
  %800 = vmatmul.mubr.bf16.gmra.mrb[0].mxu0 %v564
  %v801 = vpop.f32.mrb[0].mxu0
  %v802 = vadd.f32 0.0, %v801
  %v803 = vpop.f32.mrb[0].mxu0
  %v804 = vpop.f32.mrb[0].mxu0
  %v805 = vadd.f32 0.0, %v804
  %v806 = vpop.f32.mrb[0].mxu0
  %807 = vdwg.mxu0
  %808 = vmatprep.subr.bf16.mxu0 0
  %809 = vmatpush1.bf16.msra.mxu0 %v727
  %810 = vmatprep.subr.bf16.mxu0 0
  %811 = vmatpush1.bf16.msra.mxu0 %v728
  %812 = vmatprep.subr.bf16.mxu0 0
  %813 = vmatpush1.bf16.msra.mxu0 %v729
  %814 = vmatprep.subr.bf16.mxu0 0
  %815 = vmatpush1.bf16.msra.mxu0 %v730
  %816 = vmatprep.subr.bf16.mxu0 0
  %817 = vmatpush1.bf16.msra.mxu0 %v731
  %818 = vmatprep.subr.bf16.mxu0 0
  %819 = vmatpush1.bf16.msra.mxu0 %v732
  %820 = vmatprep.subr.bf16.mxu0 0
  %821 = vmatpush1.bf16.msra.mxu0 %v733
  %822 = vmatprep.subr.bf16.mxu0 0
  %823 = vmatpush1.bf16.msra.mxu0 %v734
  %824 = vmatprep.subr.bf16.mxu0 0
  %825 = vmatpush1.bf16.msra.mxu0 0
  %826 = vmatprep.subr.bf16.mxu0 0
  %827 = vmatpush1.bf16.msra.mxu0 0
  %828 = vmatprep.subr.bf16.mxu0 0
  %829 = vmatpush1.bf16.msra.mxu0 0
  %830 = vmatprep.subr.bf16.mxu0 0
  %831 = vmatpush1.bf16.msra.mxu0 0
  %832 = vmatprep.subr.bf16.mxu0 0
  %833 = vmatpush1.bf16.msra.mxu0 0
  %834 = vmatprep.subr.bf16.mxu0 0
  %835 = vmatpush1.bf16.msra.mxu0 0
  %836 = vmatprep.subr.bf16.mxu0 0
  %837 = vmatpush1.bf16.msra.mxu0 0
  %838 = vmatprep.subr.bf16.mxu0 0
  %839 = vmatpush1.bf16.msra.mxu0 0
  %840 = vmatprep.mubr.bf16.mxu0 0
  %841 = vmatmul.mubr.bf16.gmra.mrb[0].mxu0 %v563
  %v842 = vpop.f32.mrb[0].mxu0
  %v843 = vadd.f32 %v794, %v842
  %v844 = vpop.f32.mrb[0].mxu0
  %v845 = vpop.f32.mrb[0].mxu0
  %v846 = vadd.f32 %v797, %v845
  %v847 = vpop.f32.mrb[0].mxu0
  %848 = vmatprep.mubr.bf16.mxu0 0
  %849 = vmatmul.mubr.bf16.gmra.mrb[0].mxu0 %v566
  %v850 = vpop.f32.mrb[0].mxu0
  %v851 = vadd.f32 %v802, %v850
  %v852 = vpop.f32.mrb[0].mxu0
  %v853 = vpop.f32.mrb[0].mxu0
  %v854 = vadd.f32 %v805, %v853
  %v855 = vpop.f32.mrb[0].mxu0
  %856 = vdwg.mxu0
  %v857 = vadd.f32 %v843, %v846
  %v858 = vadd.f32 %v857, %v851
  %v859 = vadd.f32 %v858, %v854
  %v860 = vrot.slane %v859, 4
  %v861 = vadd.f32 %v859, %v860
  %v862 = vrot.slane %v861, 2
  %v863 = vadd.f32 %v861, %v862
  %v864 = vrot.slane %v863, 1
  %v865 = vadd.f32 %v863, %v864
  %v866 = vmul.f32 %v843, %v843
  %v867 = vmul.f32 %v846, %v846
  %v868 = vmul.f32 %v851, %v851
  %v869 = vmul.f32 %v854, %v854
  %v870 = vadd.f32 %v866, %v867
  %v871 = vadd.f32 %v870, %v868
  %v872 = vadd.f32 %v871, %v869
  %v873 = vrot.slane %v872, 4
  %v874 = vadd.f32 %v872, %v873
  %v875 = vrot.slane %v874, 2
  %v876 = vadd.f32 %v874, %v875
  %v877 = vrot.slane %v876, 1
  %v878 = vadd.f32 %v876, %v877
  %v879 = vsel %vm472, %v865, %v878
  %880 = vrot.lane.b32.xlu0 %v879, 8
  %v881 = vpop.permute.xlu0 %880
  %v882 = vadd.f32 %v879, %v881
  %883 = vrot.lane.b32.xlu0 %v882, 16
  %v884 = vpop.permute.xlu0 %883
  %v885 = vadd.f32 %v882, %v884
  %886 = vrot.lane.b32.xlu0 %v885, 32
  %v887 = vpop.permute.xlu0 %886
  %v888 = vadd.f32 %v885, %v887
  %889 = vrot.lane.b32.xlu0 %v888, 64
  %v890 = vpop.permute.xlu0 %889
  %v891 = vadd.f32 %v888, %v890
  %v892 = vmul.f32 %v891, 0.001953125
  %v893 = vmul.f32 %v892, %v892
  %v895 = vrot.slane %v893, 7
  %v897 = vsub.f32 %v892, %v895
  %v898 = vmax.f32 %v897, 0.0
  %v899 = vld [vmem:[%s4] sm:$0x1]
  %v900 = vadd.f32 %v898, 1e-05
  %v901 = vrsqrt.pop %v900
  %v904 = vunpack.c.l.s4 1966171168
  %v905 = vunpack.c.0.s8 %v904
  %v906 = vlaneseq
  %v907 = vshrl.u32 %v906, 7
  %v908 = vsub.s32 %v905, %v907
  %v909 = vrot.slane %v901, %v908
  %v910 = vcombine.high %v909, %v909
  %v912 = vunpack.c.l.s4 1966171168
  %v913 = vunpack.c.0.s8 %v912
  %v914 = vlaneseq
  %v915 = vshrl.u32 %v914, 7
  %v916 = vsub.s32 %v913, %v915
  %v917 = vrot.slane %v910, %v916
  %v919 = vmul.f32 %v899, %v917
  %v920 = vld [vmem:[%s5] sm:$0x1]
  %v921 = vmul.f32 %v892, %v919
  %v922 = vsub.f32 %v920, %v921
  %v924 = vlaneseq
  %v925 = vshrl.u32 %v924, 7
  %v926 = vsub.s32 0, %v925
  %v927 = vrot.slane %v919, %v926
  %v929 = vmul.f32 %v843, %v927
  %v930 = vmul.f32 %v846, %v927
  %v931 = vmul.f32 %v851, %v927
  %v932 = vmul.f32 %v854, %v927
  %v934 = vlaneseq
  %v935 = vshrl.u32 %v934, 7
  %v936 = vsub.s32 0, %v935
  %v937 = vrot.slane %v922, %v936
  %v939 = vadd.f32 %v929, %v937
  %v940 = vadd.f32 %v930, %v937
  %v941 = vadd.f32 %v931, %v937
  %v942 = vadd.f32 %v932, %v937
  %v943 = vmax.f32 %v939, 0.0
  %v944 = vmax.f32 %v940, 0.0
  %v945 = vmax.f32 %v941, 0.0
  %v946 = vmax.f32 %v942, 0.0
  %v947 = vadd.f32 %v124, %v943
  %v948 = vadd.f32 %v127, %v944
  %v949 = vadd.f32 %v132, %v945
  %v950 = vadd.f32 %v135, %v946
  %951 = vst [vmem:[#allocation2 + $0x8] sm:$0xff] %v947
  %952 = vst [vmem:[#allocation2 + $0x10] sm:$0xff] %v948
  %953 = vst [vmem:[#allocation2 + $0x28] sm:$0xff] %v949
  %954 = vst [vmem:[#allocation2 + $0x30] sm:$0xff] %v950
  %v955 = vld [vmem:[#allocation2 + $0x7] sm:$0xff]
  %v956 = vld [vmem:[#allocation2 + $0xf] sm:$0xff]
  %v957 = vld [vmem:[#allocation2 + $0x27] sm:$0xff]
  %v958 = vld [vmem:[#allocation2 + $0x2f] sm:$0xff]
  %v959 = vld [vmem:[#allocation2 + $0x8] sm:$0xff]
  %v960 = vld [vmem:[#allocation2 + $0x10] sm:$0xff]
  %v961 = vld [vmem:[#allocation2 + $0x28] sm:$0xff]
  %v962 = vld [vmem:[#allocation2 + $0x30] sm:$0xff]
  %v963 = vld [vmem:[#allocation2 + $0x9] sm:$0xff]
  %v964 = vld [vmem:[#allocation2 + $0x11] sm:$0xff]
  %v965 = vld [vmem:[#allocation2 + $0x29] sm:$0xff]
  %v966 = vld [vmem:[#allocation2 + $0x31] sm:$0xff]
  %v967 = vpack.c.bf16 %v956, %v955
  %v968 = vpack.c.bf16 %v960, %v959
  %v969 = vpack.c.bf16 %v964, %v963
  %v970 = vpack.c.bf16 %v958, %v957
  %v971 = vpack.c.bf16 %v962, %v961
  %v972 = vpack.c.bf16 %v966, %v965
  %v973 = vld [vmem:[%s3] sm:$0xf]
  %v974 = vld [vmem:[%s3 + $0x4] sm:$0xf]
  %v975 = vld [vmem:[%s3 + $0x8] sm:$0xf]
  %v976 = vld [vmem:[%s3 + $0xc] sm:$0xf]
  %v977 = vld [vmem:[%s3 + $0x10] sm:$0xf]
  %v978 = vld [vmem:[%s3 + $0x14] sm:$0xf]
  %v979 = vld [vmem:[%s3 + $0x18] sm:$0xf]
  %v980 = vld [vmem:[%s3 + $0x1c] sm:$0xf]
  %v981 = vld [vmem:[%s3 + $0x20] sm:$0xf]
  %v982 = vld [vmem:[%s3 + $0x24] sm:$0xf]
  %v983 = vld [vmem:[%s3 + $0x28] sm:$0xf]
  %v984 = vld [vmem:[%s3 + $0x2c] sm:$0xf]
  %v985 = vld [vmem:[%s3 + $0x30] sm:$0xf]
  %v986 = vld [vmem:[%s3 + $0x34] sm:$0xf]
  %v987 = vld [vmem:[%s3 + $0x38] sm:$0xf]
  %v988 = vld [vmem:[%s3 + $0x3c] sm:$0xf]
  %v989 = vld [vmem:[%s3 + $0x40] sm:$0xf]
  %v990 = vld [vmem:[%s3 + $0x44] sm:$0xf]
  %v991 = vld [vmem:[%s3 + $0x48] sm:$0xf]
  %v992 = vld [vmem:[%s3 + $0x4c] sm:$0xf]
  %v993 = vld [vmem:[%s3 + $0x50] sm:$0xf]
  %v994 = vld [vmem:[%s3 + $0x54] sm:$0xf]
  %v995 = vld [vmem:[%s3 + $0x58] sm:$0xf]
  %v996 = vld [vmem:[%s3 + $0x5c] sm:$0xf]
  %v997 = vld [vmem:[%s3 + $0x60] sm:$0xf]
  %v998 = vld [vmem:[%s3 + $0x64] sm:$0xf]
  %v999 = vld [vmem:[%s3 + $0x68] sm:$0xf]
  %v1000 = vld [vmem:[%s3 + $0x6c] sm:$0xf]
  %v1001 = vld [vmem:[%s3 + $0x70] sm:$0xf]
  %v1002 = vld [vmem:[%s3 + $0x74] sm:$0xf]
  %v1003 = vld [vmem:[%s3 + $0x78] sm:$0xf]
  %v1004 = vld [vmem:[%s3 + $0x7c] sm:$0xf]
  %v1005 = vld [vmem:[%s3 + $0x80] sm:$0xf]
  %v1006 = vld [vmem:[%s3 + $0x84] sm:$0xf]
  %v1007 = vld [vmem:[%s3 + $0x88] sm:$0xf]
  %v1008 = vld [vmem:[%s3 + $0x8c] sm:$0xf]
  %v1009 = vld [vmem:[%s3 + $0x90] sm:$0xf]
  %v1010 = vld [vmem:[%s3 + $0x94] sm:$0xf]
  %v1011 = vld [vmem:[%s3 + $0x98] sm:$0xf]
  %v1012 = vld [vmem:[%s3 + $0x9c] sm:$0xf]
  %v1013 = vld [vmem:[%s3 + $0xa0] sm:$0xf]
  %v1014 = vld [vmem:[%s3 + $0xa4] sm:$0xf]
  %v1015 = vld [vmem:[%s3 + $0xa8] sm:$0xf]
  %v1016 = vld [vmem:[%s3 + $0xac] sm:$0xf]
  %v1017 = vld [vmem:[%s3 + $0xb0] sm:$0xf]
  %v1018 = vld [vmem:[%s3 + $0xb4] sm:$0xf]
  %v1019 = vld [vmem:[%s3 + $0xb8] sm:$0xf]
  %v1020 = vld [vmem:[%s3 + $0xbc] sm:$0xf]
  %v1069 = vunpack.c.l.b16 %v973
  %v1070 = vunpack.c.l.b16 %v974
  %v1071 = vunpack.c.l.b16 %v975
  %v1072 = vunpack.c.l.b16 %v976
  %v1073 = vunpack.c.l.b16 %v977
  %v1074 = vunpack.c.l.b16 %v978
  %v1075 = vunpack.c.l.b16 %v979
  %v1076 = vunpack.c.l.b16 %v980
  %v1077 = vunpack.c.l.b16 %v981
  %v1078 = vunpack.c.l.b16 %v982
  %v1079 = vunpack.c.l.b16 %v983
  %v1080 = vunpack.c.l.b16 %v984
  %v1081 = vunpack.c.l.b16 %v985
  %v1082 = vunpack.c.l.b16 %v986
  %v1083 = vunpack.c.l.b16 %v987
  %v1084 = vunpack.c.l.b16 %v988
  %v1085 = vunpack.c.l.b16 %v989
  %v1086 = vunpack.c.l.b16 %v990
  %v1087 = vunpack.c.l.b16 %v991
  %v1088 = vunpack.c.l.b16 %v992
  %v1089 = vunpack.c.l.b16 %v993
  %v1090 = vunpack.c.l.b16 %v994
  %v1091 = vunpack.c.l.b16 %v995
  %v1092 = vunpack.c.l.b16 %v996
  %v1093 = vunpack.c.l.b16 %v997
  %v1094 = vunpack.c.l.b16 %v998
  %v1095 = vunpack.c.l.b16 %v999
  %v1096 = vunpack.c.l.b16 %v1000
  %v1097 = vunpack.c.l.b16 %v1001
  %v1098 = vunpack.c.l.b16 %v1002
  %v1099 = vunpack.c.l.b16 %v1003
  %v1100 = vunpack.c.l.b16 %v1004
  %v1101 = vunpack.c.l.b16 %v1005
  %v1102 = vunpack.c.l.b16 %v1006
  %v1103 = vunpack.c.l.b16 %v1007
  %v1104 = vunpack.c.l.b16 %v1008
  %v1105 = vunpack.c.l.b16 %v1009
  %v1106 = vunpack.c.l.b16 %v1010
  %v1107 = vunpack.c.l.b16 %v1011
  %v1108 = vunpack.c.l.b16 %v1012
  %v1109 = vunpack.c.l.b16 %v1013
  %v1110 = vunpack.c.l.b16 %v1014
  %v1111 = vunpack.c.l.b16 %v1015
  %v1112 = vunpack.c.l.b16 %v1016
  %v1113 = vunpack.c.l.b16 %v1017
  %v1114 = vunpack.c.l.b16 %v1018
  %v1115 = vunpack.c.l.b16 %v1019
  %v1116 = vunpack.c.l.b16 %v1020
  %v1117 = vpack.c.b16 %v1070, %v1069
  %v1118 = vpack.c.b16 %v1072, %v1071
  %v1119 = vpack.c.b16 %v1074, %v1073
  %v1120 = vpack.c.b16 %v1076, %v1075
  %v1121 = vpack.c.b16 %v1078, %v1077
  %v1122 = vpack.c.b16 %v1080, %v1079
  %v1123 = vpack.c.b16 %v1082, %v1081
  %v1124 = vpack.c.b16 %v1084, %v1083
  %v1125 = vpack.c.b16 %v1086, %v1085
  %v1126 = vpack.c.b16 %v1088, %v1087
  %v1127 = vpack.c.b16 %v1090, %v1089
  %v1128 = vpack.c.b16 %v1092, %v1091
  %v1129 = vpack.c.b16 %v1094, %v1093
  %v1130 = vpack.c.b16 %v1096, %v1095
  %v1131 = vpack.c.b16 %v1098, %v1097
  %v1132 = vpack.c.b16 %v1100, %v1099
  %v1133 = vpack.c.b16 %v1102, %v1101
  %v1134 = vpack.c.b16 %v1104, %v1103
  %v1135 = vpack.c.b16 %v1106, %v1105
  %v1136 = vpack.c.b16 %v1108, %v1107
  %v1137 = vpack.c.b16 %v1110, %v1109
  %v1138 = vpack.c.b16 %v1112, %v1111
  %v1139 = vpack.c.b16 %v1114, %v1113
  %v1140 = vpack.c.b16 %v1116, %v1115
  %1165 = vmatprep.subr.bf16.mxu0 0
  %1166 = vmatpush1.bf16.msra.mxu0 %v1117
  %1167 = vmatprep.subr.bf16.mxu0 0
  %1168 = vmatpush1.bf16.msra.mxu0 %v1118
  %1169 = vmatprep.subr.bf16.mxu0 0
  %1170 = vmatpush1.bf16.msra.mxu0 %v1119
  %1171 = vmatprep.subr.bf16.mxu0 0
  %1172 = vmatpush1.bf16.msra.mxu0 %v1120
  %1173 = vmatprep.subr.bf16.mxu0 0
  %1174 = vmatpush1.bf16.msra.mxu0 %v1121
  %1175 = vmatprep.subr.bf16.mxu0 0
  %1176 = vmatpush1.bf16.msra.mxu0 %v1122
  %1177 = vmatprep.subr.bf16.mxu0 0
  %1178 = vmatpush1.bf16.msra.mxu0 %v1123
  %1179 = vmatprep.subr.bf16.mxu0 0
  %1180 = vmatpush1.bf16.msra.mxu0 %v1124
  %1181 = vmatprep.subr.bf16.mxu0 0
  %1182 = vmatpush1.bf16.msra.mxu0 %v1125
  %1183 = vmatprep.subr.bf16.mxu0 0
  %1184 = vmatpush1.bf16.msra.mxu0 %v1126
  %1185 = vmatprep.subr.bf16.mxu0 0
  %1186 = vmatpush1.bf16.msra.mxu0 %v1127
  %1187 = vmatprep.subr.bf16.mxu0 0
  %1188 = vmatpush1.bf16.msra.mxu0 %v1128
  %1189 = vmatprep.subr.bf16.mxu0 0
  %1190 = vmatpush1.bf16.msra.mxu0 %v1129
  %1191 = vmatprep.subr.bf16.mxu0 0
  %1192 = vmatpush1.bf16.msra.mxu0 %v1130
  %1193 = vmatprep.subr.bf16.mxu0 0
  %1194 = vmatpush1.bf16.msra.mxu0 %v1131
  %1195 = vmatprep.subr.bf16.mxu0 0
  %1196 = vmatpush1.bf16.msra.mxu0 %v1132
  %1197 = vmatprep.mubr.bf16.mxu0 %v968
  %1198 = vmatmul.mubr.bf16.gmra.mrb[0].mxu0 %v967
  %v1199 = vpop.f32.mrb[0].mxu0
  %v1200 = vadd.f32 0.0, %v1199
  %v1201 = vpop.f32.mrb[0].mxu0
  %v1202 = vpop.f32.mrb[0].mxu0
  %v1203 = vadd.f32 0.0, %v1202
  %v1204 = vpop.f32.mrb[0].mxu0
  %1205 = vmatprep.mubr.bf16.mxu0 %v971
  %1206 = vmatmul.mubr.bf16.gmra.mrb[0].mxu0 %v970
  %v1207 = vpop.f32.mrb[0].mxu0
  %v1208 = vadd.f32 0.0, %v1207
  %v1209 = vpop.f32.mrb[0].mxu0
  %v1210 = vpop.f32.mrb[0].mxu0
  %v1211 = vadd.f32 0.0, %v1210
  %v1212 = vpop.f32.mrb[0].mxu0
  %1213 = vdwg.mxu0
  %1214 = vmatprep.subr.bf16.mxu0 0
  %1215 = vmatpush1.bf16.msra.mxu0 %v1133
  %1216 = vmatprep.subr.bf16.mxu0 0
  %1217 = vmatpush1.bf16.msra.mxu0 %v1134
  %1218 = vmatprep.subr.bf16.mxu0 0
  %1219 = vmatpush1.bf16.msra.mxu0 %v1135
  %1220 = vmatprep.subr.bf16.mxu0 0
  %1221 = vmatpush1.bf16.msra.mxu0 %v1136
  %1222 = vmatprep.subr.bf16.mxu0 0
  %1223 = vmatpush1.bf16.msra.mxu0 %v1137
  %1224 = vmatprep.subr.bf16.mxu0 0
  %1225 = vmatpush1.bf16.msra.mxu0 %v1138
  %1226 = vmatprep.subr.bf16.mxu0 0
  %1227 = vmatpush1.bf16.msra.mxu0 %v1139
  %1228 = vmatprep.subr.bf16.mxu0 0
  %1229 = vmatpush1.bf16.msra.mxu0 %v1140
  %1230 = vmatprep.subr.bf16.mxu0 0
  %1231 = vmatpush1.bf16.msra.mxu0 0
  %1232 = vmatprep.subr.bf16.mxu0 0
  %1233 = vmatpush1.bf16.msra.mxu0 0
  %1234 = vmatprep.subr.bf16.mxu0 0
  %1235 = vmatpush1.bf16.msra.mxu0 0
  %1236 = vmatprep.subr.bf16.mxu0 0
  %1237 = vmatpush1.bf16.msra.mxu0 0
  %1238 = vmatprep.subr.bf16.mxu0 0
  %1239 = vmatpush1.bf16.msra.mxu0 0
  %1240 = vmatprep.subr.bf16.mxu0 0
  %1241 = vmatpush1.bf16.msra.mxu0 0
  %1242 = vmatprep.subr.bf16.mxu0 0
  %1243 = vmatpush1.bf16.msra.mxu0 0
  %1244 = vmatprep.subr.bf16.mxu0 0
  %1245 = vmatpush1.bf16.msra.mxu0 0
  %1246 = vmatprep.mubr.bf16.mxu0 0
  %1247 = vmatmul.mubr.bf16.gmra.mrb[0].mxu0 %v969
  %v1248 = vpop.f32.mrb[0].mxu0
  %v1249 = vadd.f32 %v1200, %v1248
  %v1250 = vpop.f32.mrb[0].mxu0
  %v1251 = vpop.f32.mrb[0].mxu0
  %v1252 = vadd.f32 %v1203, %v1251
  %v1253 = vpop.f32.mrb[0].mxu0
  %1254 = vmatprep.mubr.bf16.mxu0 0
  %1255 = vmatmul.mubr.bf16.gmra.mrb[0].mxu0 %v972
  %v1256 = vpop.f32.mrb[0].mxu0
  %v1257 = vadd.f32 %v1208, %v1256
  %v1258 = vpop.f32.mrb[0].mxu0
  %v1259 = vpop.f32.mrb[0].mxu0
  %v1260 = vadd.f32 %v1211, %v1259
  %v1261 = vpop.f32.mrb[0].mxu0
  %1262 = vdwg.mxu0
  %v1263 = vadd.f32 %v1249, %v1252
  %v1264 = vadd.f32 %v1263, %v1257
  %v1265 = vadd.f32 %v1264, %v1260
  %v1266 = vrot.slane %v1265, 4
  %v1267 = vadd.f32 %v1265, %v1266
  %v1268 = vrot.slane %v1267, 2
  %v1269 = vadd.f32 %v1267, %v1268
  %v1270 = vrot.slane %v1269, 1
  %v1271 = vadd.f32 %v1269, %v1270
  %v1272 = vmul.f32 %v1249, %v1249
  %v1273 = vmul.f32 %v1252, %v1252
  %v1274 = vmul.f32 %v1257, %v1257
  %v1275 = vmul.f32 %v1260, %v1260
  %v1276 = vadd.f32 %v1272, %v1273
  %v1277 = vadd.f32 %v1276, %v1274
  %v1278 = vadd.f32 %v1277, %v1275
  %v1279 = vrot.slane %v1278, 4
  %v1280 = vadd.f32 %v1278, %v1279
  %v1281 = vrot.slane %v1280, 2
  %v1282 = vadd.f32 %v1280, %v1281
  %v1283 = vrot.slane %v1282, 1
  %v1284 = vadd.f32 %v1282, %v1283
  %v1285 = vsel %vm472, %v1271, %v1284
  %1286 = vrot.lane.b32.xlu0 %v1285, 8
  %v1287 = vpop.permute.xlu0 %1286
  %v1288 = vadd.f32 %v1285, %v1287
  %1289 = vrot.lane.b32.xlu0 %v1288, 16
  %v1290 = vpop.permute.xlu0 %1289
  %v1291 = vadd.f32 %v1288, %v1290
  %1292 = vrot.lane.b32.xlu0 %v1291, 32
  %v1293 = vpop.permute.xlu0 %1292
  %v1294 = vadd.f32 %v1291, %v1293
  %1295 = vrot.lane.b32.xlu0 %v1294, 64
  %v1296 = vpop.permute.xlu0 %1295
  %v1297 = vadd.f32 %v1294, %v1296
  %v1298 = vmul.f32 %v1297, 0.001953125
  %v1299 = vmul.f32 %v1298, %v1298
  %v1301 = vrot.slane %v1299, 7
  %v1303 = vsub.f32 %v1298, %v1301
  %v1304 = vmax.f32 %v1303, 0.0
  %v1305 = vld [vmem:[%s4] sm:$0x1]
  %v1306 = vadd.f32 %v1304, 1e-05
  %v1307 = vrsqrt.pop %v1306
  %v1310 = vunpack.c.l.s4 1966171168
  %v1311 = vunpack.c.0.s8 %v1310
  %v1312 = vlaneseq
  %v1313 = vshrl.u32 %v1312, 7
  %v1314 = vsub.s32 %v1311, %v1313
  %v1315 = vrot.slane %v1307, %v1314
  %v1316 = vcombine.high %v1315, %v1315
  %v1318 = vunpack.c.l.s4 1966171168
  %v1319 = vunpack.c.0.s8 %v1318
  %v1320 = vlaneseq
  %v1321 = vshrl.u32 %v1320, 7
  %v1322 = vsub.s32 %v1319, %v1321
  %v1323 = vrot.slane %v1316, %v1322
  %v1325 = vmul.f32 %v1305, %v1323
  %v1326 = vld [vmem:[%s5] sm:$0x1]
  %v1327 = vmul.f32 %v1298, %v1325
  %v1328 = vsub.f32 %v1326, %v1327
  %v1330 = vlaneseq
  %v1331 = vshrl.u32 %v1330, 7
  %v1332 = vsub.s32 0, %v1331
  %v1333 = vrot.slane %v1325, %v1332
  %v1335 = vmul.f32 %v1249, %v1333
  %v1336 = vmul.f32 %v1252, %v1333
  %v1337 = vmul.f32 %v1257, %v1333
  %v1338 = vmul.f32 %v1260, %v1333
  %v1340 = vlaneseq
  %v1341 = vshrl.u32 %v1340, 7
  %v1342 = vsub.s32 0, %v1341
  %v1343 = vrot.slane %v1328, %v1342
  %v1345 = vadd.f32 %v1335, %v1343
  %v1346 = vadd.f32 %v1336, %v1343
  %v1347 = vadd.f32 %v1337, %v1343
  %v1348 = vadd.f32 %v1338, %v1343
  %v1349 = vmax.f32 %v1345, 0.0
  %v1350 = vmax.f32 %v1346, 0.0
  %v1351 = vmax.f32 %v1347, 0.0
  %v1352 = vmax.f32 %v1348, 0.0
  %1353 = vst [vmem:[#allocation2 + $0x8] sm:$0xff] %v1349
  %1354 = vst [vmem:[#allocation2 + $0x10] sm:$0xff] %v1350
  %1355 = vst [vmem:[#allocation2 + $0x28] sm:$0xff] %v1351
  %1356 = vst [vmem:[#allocation2 + $0x30] sm:$0xff] %v1352
  %v1357 = vld [vmem:[#allocation2 + $0x7] sm:$0xff]
  %v1358 = vld [vmem:[#allocation2 + $0xf] sm:$0xff]
  %v1359 = vld [vmem:[#allocation2 + $0x27] sm:$0xff]
  %v1360 = vld [vmem:[#allocation2 + $0x2f] sm:$0xff]
  %v1361 = vld [vmem:[#allocation2 + $0x8] sm:$0xff]
  %v1362 = vld [vmem:[#allocation2 + $0x10] sm:$0xff]
  %v1363 = vld [vmem:[#allocation2 + $0x28] sm:$0xff]
  %v1364 = vld [vmem:[#allocation2 + $0x30] sm:$0xff]
  %v1365 = vld [vmem:[#allocation2 + $0x9] sm:$0xff]
  %v1366 = vld [vmem:[#allocation2 + $0x11] sm:$0xff]
  %v1367 = vld [vmem:[#allocation2 + $0x29] sm:$0xff]
  %v1368 = vld [vmem:[#allocation2 + $0x31] sm:$0xff]
  %v1369 = vpack.c.bf16 %v1358, %v1357
  %v1370 = vpack.c.bf16 %v1362, %v1361
  %v1371 = vpack.c.bf16 %v1366, %v1365
  %v1372 = vpack.c.bf16 %v1360, %v1359
  %v1373 = vpack.c.bf16 %v1364, %v1363
  %v1374 = vpack.c.bf16 %v1368, %v1367
  %v1375 = vld [vmem:[%s6] sm:$0xf]
  %v1376 = vld [vmem:[%s6 + $0x4] sm:$0xf]
  %v1377 = vld [vmem:[%s6 + $0x8] sm:$0xf]
  %v1378 = vld [vmem:[%s6 + $0xc] sm:$0xf]
  %v1379 = vld [vmem:[%s6 + $0x10] sm:$0xf]
  %v1380 = vld [vmem:[%s6 + $0x14] sm:$0xf]
  %v1381 = vld [vmem:[%s6 + $0x18] sm:$0xf]
  %v1382 = vld [vmem:[%s6 + $0x1c] sm:$0xf]
  %v1383 = vld [vmem:[%s6 + $0x20] sm:$0xf]
  %v1384 = vld [vmem:[%s6 + $0x24] sm:$0xf]
  %v1385 = vld [vmem:[%s6 + $0x28] sm:$0xf]
  %v1386 = vld [vmem:[%s6 + $0x2c] sm:$0xf]
  %v1387 = vld [vmem:[%s6 + $0x30] sm:$0xf]
  %v1388 = vld [vmem:[%s6 + $0x34] sm:$0xf]
  %v1389 = vld [vmem:[%s6 + $0x38] sm:$0xf]
  %v1390 = vld [vmem:[%s6 + $0x3c] sm:$0xf]
  %v1391 = vld [vmem:[%s6 + $0x40] sm:$0xf]
  %v1392 = vld [vmem:[%s6 + $0x44] sm:$0xf]
  %v1393 = vld [vmem:[%s6 + $0x48] sm:$0xf]
  %v1394 = vld [vmem:[%s6 + $0x4c] sm:$0xf]
  %v1395 = vld [vmem:[%s6 + $0x50] sm:$0xf]
  %v1396 = vld [vmem:[%s6 + $0x54] sm:$0xf]
  %v1397 = vld [vmem:[%s6 + $0x58] sm:$0xf]
  %v1398 = vld [vmem:[%s6 + $0x5c] sm:$0xf]
  %v1399 = vld [vmem:[%s6 + $0x60] sm:$0xf]
  %v1400 = vld [vmem:[%s6 + $0x64] sm:$0xf]
  %v1401 = vld [vmem:[%s6 + $0x68] sm:$0xf]
  %v1402 = vld [vmem:[%s6 + $0x6c] sm:$0xf]
  %v1403 = vld [vmem:[%s6 + $0x70] sm:$0xf]
  %v1404 = vld [vmem:[%s6 + $0x74] sm:$0xf]
  %v1405 = vld [vmem:[%s6 + $0x78] sm:$0xf]
  %v1406 = vld [vmem:[%s6 + $0x7c] sm:$0xf]
  %v1407 = vld [vmem:[%s6 + $0x80] sm:$0xf]
  %v1408 = vld [vmem:[%s6 + $0x84] sm:$0xf]
  %v1409 = vld [vmem:[%s6 + $0x88] sm:$0xf]
  %v1410 = vld [vmem:[%s6 + $0x8c] sm:$0xf]
  %v1411 = vld [vmem:[%s6 + $0x90] sm:$0xf]
  %v1412 = vld [vmem:[%s6 + $0x94] sm:$0xf]
  %v1413 = vld [vmem:[%s6 + $0x98] sm:$0xf]
  %v1414 = vld [vmem:[%s6 + $0x9c] sm:$0xf]
  %v1415 = vld [vmem:[%s6 + $0xa0] sm:$0xf]
  %v1416 = vld [vmem:[%s6 + $0xa4] sm:$0xf]
  %v1417 = vld [vmem:[%s6 + $0xa8] sm:$0xf]
  %v1418 = vld [vmem:[%s6 + $0xac] sm:$0xf]
  %v1419 = vld [vmem:[%s6 + $0xb0] sm:$0xf]
  %v1420 = vld [vmem:[%s6 + $0xb4] sm:$0xf]
  %v1421 = vld [vmem:[%s6 + $0xb8] sm:$0xf]
  %v1422 = vld [vmem:[%s6 + $0xbc] sm:$0xf]
  %v1471 = vunpack.c.l.b16 %v1375
  %v1472 = vunpack.c.l.b16 %v1376
  %v1473 = vunpack.c.l.b16 %v1377
  %v1474 = vunpack.c.l.b16 %v1378
  %v1475 = vunpack.c.l.b16 %v1379
  %v1476 = vunpack.c.l.b16 %v1380
  %v1477 = vunpack.c.l.b16 %v1381
  %v1478 = vunpack.c.l.b16 %v1382
  %v1479 = vunpack.c.l.b16 %v1383
  %v1480 = vunpack.c.l.b16 %v1384
  %v1481 = vunpack.c.l.b16 %v1385
  %v1482 = vunpack.c.l.b16 %v1386
  %v1483 = vunpack.c.l.b16 %v1387
  %v1484 = vunpack.c.l.b16 %v1388
  %v1485 = vunpack.c.l.b16 %v1389
  %v1486 = vunpack.c.l.b16 %v1390
  %v1487 = vunpack.c.l.b16 %v1391
  %v1488 = vunpack.c.l.b16 %v1392
  %v1489 = vunpack.c.l.b16 %v1393
  %v1490 = vunpack.c.l.b16 %v1394
  %v1491 = vunpack.c.l.b16 %v1395
  %v1492 = vunpack.c.l.b16 %v1396
  %v1493 = vunpack.c.l.b16 %v1397
  %v1494 = vunpack.c.l.b16 %v1398
  %v1495 = vunpack.c.l.b16 %v1399
  %v1496 = vunpack.c.l.b16 %v1400
  %v1497 = vunpack.c.l.b16 %v1401
  %v1498 = vunpack.c.l.b16 %v1402
  %v1499 = vunpack.c.l.b16 %v1403
  %v1500 = vunpack.c.l.b16 %v1404
  %v1501 = vunpack.c.l.b16 %v1405
  %v1502 = vunpack.c.l.b16 %v1406
  %v1503 = vunpack.c.l.b16 %v1407
  %v1504 = vunpack.c.l.b16 %v1408
  %v1505 = vunpack.c.l.b16 %v1409
  %v1506 = vunpack.c.l.b16 %v1410
  %v1507 = vunpack.c.l.b16 %v1411
  %v1508 = vunpack.c.l.b16 %v1412
  %v1509 = vunpack.c.l.b16 %v1413
  %v1510 = vunpack.c.l.b16 %v1414
  %v1511 = vunpack.c.l.b16 %v1415
  %v1512 = vunpack.c.l.b16 %v1416
  %v1513 = vunpack.c.l.b16 %v1417
  %v1514 = vunpack.c.l.b16 %v1418
  %v1515 = vunpack.c.l.b16 %v1419
  %v1516 = vunpack.c.l.b16 %v1420
  %v1517 = vunpack.c.l.b16 %v1421
  %v1518 = vunpack.c.l.b16 %v1422
  %v1519 = vpack.c.b16 %v1472, %v1471
  %v1520 = vpack.c.b16 %v1474, %v1473
  %v1521 = vpack.c.b16 %v1476, %v1475
  %v1522 = vpack.c.b16 %v1478, %v1477
  %v1523 = vpack.c.b16 %v1480, %v1479
  %v1524 = vpack.c.b16 %v1482, %v1481
  %v1525 = vpack.c.b16 %v1484, %v1483
  %v1526 = vpack.c.b16 %v1486, %v1485
  %v1527 = vpack.c.b16 %v1488, %v1487
  %v1528 = vpack.c.b16 %v1490, %v1489
  %v1529 = vpack.c.b16 %v1492, %v1491
  %v1530 = vpack.c.b16 %v1494, %v1493
  %v1531 = vpack.c.b16 %v1496, %v1495
  %v1532 = vpack.c.b16 %v1498, %v1497
  %v1533 = vpack.c.b16 %v1500, %v1499
  %v1534 = vpack.c.b16 %v1502, %v1501
  %v1535 = vpack.c.b16 %v1504, %v1503
  %v1536 = vpack.c.b16 %v1506, %v1505
  %v1537 = vpack.c.b16 %v1508, %v1507
  %v1538 = vpack.c.b16 %v1510, %v1509
  %v1539 = vpack.c.b16 %v1512, %v1511
  %v1540 = vpack.c.b16 %v1514, %v1513
  %v1541 = vpack.c.b16 %v1516, %v1515
  %v1542 = vpack.c.b16 %v1518, %v1517
  %1567 = vmatprep.subr.bf16.mxu0 0
  %1568 = vmatpush1.bf16.msra.mxu0 %v1519
  %1569 = vmatprep.subr.bf16.mxu0 0
  %1570 = vmatpush1.bf16.msra.mxu0 %v1520
  %1571 = vmatprep.subr.bf16.mxu0 0
  %1572 = vmatpush1.bf16.msra.mxu0 %v1521
  %1573 = vmatprep.subr.bf16.mxu0 0
  %1574 = vmatpush1.bf16.msra.mxu0 %v1522
  %1575 = vmatprep.subr.bf16.mxu0 0
  %1576 = vmatpush1.bf16.msra.mxu0 %v1523
  %1577 = vmatprep.subr.bf16.mxu0 0
  %1578 = vmatpush1.bf16.msra.mxu0 %v1524
  %1579 = vmatprep.subr.bf16.mxu0 0
  %1580 = vmatpush1.bf16.msra.mxu0 %v1525
  %1581 = vmatprep.subr.bf16.mxu0 0
  %1582 = vmatpush1.bf16.msra.mxu0 %v1526
  %1583 = vmatprep.subr.bf16.mxu0 0
  %1584 = vmatpush1.bf16.msra.mxu0 %v1527
  %1585 = vmatprep.subr.bf16.mxu0 0
  %1586 = vmatpush1.bf16.msra.mxu0 %v1528
  %1587 = vmatprep.subr.bf16.mxu0 0
  %1588 = vmatpush1.bf16.msra.mxu0 %v1529
  %1589 = vmatprep.subr.bf16.mxu0 0
  %1590 = vmatpush1.bf16.msra.mxu0 %v1530
  %1591 = vmatprep.subr.bf16.mxu0 0
  %1592 = vmatpush1.bf16.msra.mxu0 %v1531
  %1593 = vmatprep.subr.bf16.mxu0 0
  %1594 = vmatpush1.bf16.msra.mxu0 %v1532
  %1595 = vmatprep.subr.bf16.mxu0 0
  %1596 = vmatpush1.bf16.msra.mxu0 %v1533
  %1597 = vmatprep.subr.bf16.mxu0 0
  %1598 = vmatpush1.bf16.msra.mxu0 %v1534
  %1599 = vmatprep.mubr.bf16.mxu0 %v1370
  %1600 = vmatmul.mubr.bf16.gmra.mrb[0].mxu0 %v1369
  %v1601 = vpop.f32.mrb[0].mxu0
  %v1602 = vadd.f32 0.0, %v1601
  %v1603 = vpop.f32.mrb[0].mxu0
  %v1604 = vpop.f32.mrb[0].mxu0
  %v1605 = vadd.f32 0.0, %v1604
  %v1606 = vpop.f32.mrb[0].mxu0
  %1607 = vmatprep.mubr.bf16.mxu0 %v1373
  %1608 = vmatmul.mubr.bf16.gmra.mrb[0].mxu0 %v1372
  %v1609 = vpop.f32.mrb[0].mxu0
  %v1610 = vadd.f32 0.0, %v1609
  %v1611 = vpop.f32.mrb[0].mxu0
  %v1612 = vpop.f32.mrb[0].mxu0
  %v1613 = vadd.f32 0.0, %v1612
  %v1614 = vpop.f32.mrb[0].mxu0
  %1615 = vdwg.mxu0
  %1616 = vmatprep.subr.bf16.mxu0 0
  %1617 = vmatpush1.bf16.msra.mxu0 %v1535
  %1618 = vmatprep.subr.bf16.mxu0 0
  %1619 = vmatpush1.bf16.msra.mxu0 %v1536
  %1620 = vmatprep.subr.bf16.mxu0 0
  %1621 = vmatpush1.bf16.msra.mxu0 %v1537
  %1622 = vmatprep.subr.bf16.mxu0 0
  %1623 = vmatpush1.bf16.msra.mxu0 %v1538
  %1624 = vmatprep.subr.bf16.mxu0 0
  %1625 = vmatpush1.bf16.msra.mxu0 %v1539
  %1626 = vmatprep.subr.bf16.mxu0 0
  %1627 = vmatpush1.bf16.msra.mxu0 %v1540
  %1628 = vmatprep.subr.bf16.mxu0 0
  %1629 = vmatpush1.bf16.msra.mxu0 %v1541
  %1630 = vmatprep.subr.bf16.mxu0 0
  %1631 = vmatpush1.bf16.msra.mxu0 %v1542
  %1632 = vmatprep.subr.bf16.mxu0 0
  %1633 = vmatpush1.bf16.msra.mxu0 0
  %1634 = vmatprep.subr.bf16.mxu0 0
  %1635 = vmatpush1.bf16.msra.mxu0 0
  %1636 = vmatprep.subr.bf16.mxu0 0
  %1637 = vmatpush1.bf16.msra.mxu0 0
  %1638 = vmatprep.subr.bf16.mxu0 0
  %1639 = vmatpush1.bf16.msra.mxu0 0
  %1640 = vmatprep.subr.bf16.mxu0 0
  %1641 = vmatpush1.bf16.msra.mxu0 0
  %1642 = vmatprep.subr.bf16.mxu0 0
  %1643 = vmatpush1.bf16.msra.mxu0 0
  %1644 = vmatprep.subr.bf16.mxu0 0
  %1645 = vmatpush1.bf16.msra.mxu0 0
  %1646 = vmatprep.subr.bf16.mxu0 0
  %1647 = vmatpush1.bf16.msra.mxu0 0
  %1648 = vmatprep.mubr.bf16.mxu0 0
  %1649 = vmatmul.mubr.bf16.gmra.mrb[0].mxu0 %v1371
  %v1650 = vpop.f32.mrb[0].mxu0
  %v1651 = vadd.f32 %v1602, %v1650
  %v1652 = vpop.f32.mrb[0].mxu0
  %v1653 = vpop.f32.mrb[0].mxu0
  %v1654 = vadd.f32 %v1605, %v1653
  %v1655 = vpop.f32.mrb[0].mxu0
  %1656 = vmatprep.mubr.bf16.mxu0 0
  %1657 = vmatmul.mubr.bf16.gmra.mrb[0].mxu0 %v1374
  %v1658 = vpop.f32.mrb[0].mxu0
  %v1659 = vadd.f32 %v1610, %v1658
  %v1660 = vpop.f32.mrb[0].mxu0
  %v1661 = vpop.f32.mrb[0].mxu0
  %v1662 = vadd.f32 %v1613, %v1661
  %v1663 = vpop.f32.mrb[0].mxu0
  %1664 = vdwg.mxu0
  %v1665 = vadd.f32 %v1651, %v1654
  %v1666 = vadd.f32 %v1665, %v1659
  %v1667 = vadd.f32 %v1666, %v1662
  %v1668 = vrot.slane %v1667, 4
  %v1669 = vadd.f32 %v1667, %v1668
  %v1670 = vrot.slane %v1669, 2
  %v1671 = vadd.f32 %v1669, %v1670
  %v1672 = vrot.slane %v1671, 1
  %v1673 = vadd.f32 %v1671, %v1672
  %v1674 = vmul.f32 %v1651, %v1651
  %v1675 = vmul.f32 %v1654, %v1654
  %v1676 = vmul.f32 %v1659, %v1659
  %v1677 = vmul.f32 %v1662, %v1662
  %v1678 = vadd.f32 %v1674, %v1675
  %v1679 = vadd.f32 %v1678, %v1676
  %v1680 = vadd.f32 %v1679, %v1677
  %v1681 = vrot.slane %v1680, 4
  %v1682 = vadd.f32 %v1680, %v1681
  %v1683 = vrot.slane %v1682, 2
  %v1684 = vadd.f32 %v1682, %v1683
  %v1685 = vrot.slane %v1684, 1
  %v1686 = vadd.f32 %v1684, %v1685
  %v1687 = vsel %vm472, %v1673, %v1686
  %1688 = vrot.lane.b32.xlu0 %v1687, 8
  %v1689 = vpop.permute.xlu0 %1688
  %v1690 = vadd.f32 %v1687, %v1689
  %1691 = vrot.lane.b32.xlu0 %v1690, 16
  %v1692 = vpop.permute.xlu0 %1691
  %v1693 = vadd.f32 %v1690, %v1692
  %1694 = vrot.lane.b32.xlu0 %v1693, 32
  %v1695 = vpop.permute.xlu0 %1694
  %v1696 = vadd.f32 %v1693, %v1695
  %1697 = vrot.lane.b32.xlu0 %v1696, 64
  %v1698 = vpop.permute.xlu0 %1697
  %v1699 = vadd.f32 %v1696, %v1698
  %v1700 = vmul.f32 %v1699, 0.001953125
  %v1701 = vmul.f32 %v1700, %v1700
  %v1703 = vrot.slane %v1701, 7
  %v1705 = vsub.f32 %v1700, %v1703
  %v1706 = vmax.f32 %v1705, 0.0
  %v1707 = vld [vmem:[%s7] sm:$0x1]
  %v1708 = vadd.f32 %v1706, 1e-05
  %v1709 = vrsqrt.pop %v1708
  %v1712 = vunpack.c.l.s4 1966171168
  %v1713 = vunpack.c.0.s8 %v1712
  %v1714 = vlaneseq
  %v1715 = vshrl.u32 %v1714, 7
  %v1716 = vsub.s32 %v1713, %v1715
  %v1717 = vrot.slane %v1709, %v1716
  %v1718 = vcombine.high %v1717, %v1717
  %v1720 = vunpack.c.l.s4 1966171168
  %v1721 = vunpack.c.0.s8 %v1720
  %v1722 = vlaneseq
  %v1723 = vshrl.u32 %v1722, 7
  %v1724 = vsub.s32 %v1721, %v1723
  %v1725 = vrot.slane %v1718, %v1724
  %v1727 = vmul.f32 %v1707, %v1725
  %v1728 = vld [vmem:[%s8] sm:$0x1]
  %v1729 = vmul.f32 %v1700, %v1727
  %v1730 = vsub.f32 %v1728, %v1729
  %v1732 = vlaneseq
  %v1733 = vshrl.u32 %v1732, 7
  %v1734 = vsub.s32 0, %v1733
  %v1735 = vrot.slane %v1727, %v1734
  %v1737 = vmul.f32 %v1651, %v1735
  %v1738 = vmul.f32 %v1654, %v1735
  %v1739 = vmul.f32 %v1659, %v1735
  %v1740 = vmul.f32 %v1662, %v1735
  %v1742 = vlaneseq
  %v1743 = vshrl.u32 %v1742, 7
  %v1744 = vsub.s32 0, %v1743
  %v1745 = vrot.slane %v1730, %v1744
  %v1747 = vadd.f32 %v1737, %v1745
  %v1748 = vadd.f32 %v1738, %v1745
  %v1749 = vadd.f32 %v1739, %v1745
  %v1750 = vadd.f32 %v1740, %v1745
  %v1751 = vmax.f32 %v1747, 0.0
  %v1752 = vmax.f32 %v1748, 0.0
  %v1753 = vmax.f32 %v1749, 0.0
  %v1754 = vmax.f32 %v1750, 0.0
  %v1755 = vadd.f32 %v1349, %v1751
  %v1756 = vadd.f32 %v1350, %v1752
  %v1757 = vadd.f32 %v1351, %v1753
  %v1758 = vadd.f32 %v1352, %v1754
  %1759 = vst [vmem:[#allocation2 + $0x8] sm:$0xff] %v1755
  %1760 = vst [vmem:[#allocation2 + $0x10] sm:$0xff] %v1756
  %1761 = vst [vmem:[#allocation2 + $0x28] sm:$0xff] %v1757
  %1762 = vst [vmem:[#allocation2 + $0x30] sm:$0xff] %v1758
  %v1763 = vld [vmem:[#allocation2 + $0x7] sm:$0xff]
  %v1764 = vld [vmem:[#allocation2 + $0xf] sm:$0xff]
  %v1765 = vld [vmem:[#allocation2 + $0x27] sm:$0xff]
  %v1766 = vld [vmem:[#allocation2 + $0x2f] sm:$0xff]
  %v1767 = vld [vmem:[#allocation2 + $0x8] sm:$0xff]
  %v1768 = vld [vmem:[#allocation2 + $0x10] sm:$0xff]
  %v1769 = vld [vmem:[#allocation2 + $0x28] sm:$0xff]
  %v1770 = vld [vmem:[#allocation2 + $0x30] sm:$0xff]
  %v1771 = vld [vmem:[#allocation2 + $0x9] sm:$0xff]
  %v1772 = vld [vmem:[#allocation2 + $0x11] sm:$0xff]
  %v1773 = vld [vmem:[#allocation2 + $0x29] sm:$0xff]
  %v1774 = vld [vmem:[#allocation2 + $0x31] sm:$0xff]
  %v1775 = vpack.c.bf16 %v1764, %v1763
  %v1776 = vpack.c.bf16 %v1768, %v1767
  %v1777 = vpack.c.bf16 %v1772, %v1771
  %v1778 = vpack.c.bf16 %v1766, %v1765
  %v1779 = vpack.c.bf16 %v1770, %v1769
  %v1780 = vpack.c.bf16 %v1774, %v1773
  %v1781 = vld [vmem:[%s6] sm:$0xf]
  %v1782 = vld [vmem:[%s6 + $0x4] sm:$0xf]
  %v1783 = vld [vmem:[%s6 + $0x8] sm:$0xf]
  %v1784 = vld [vmem:[%s6 + $0xc] sm:$0xf]
  %v1785 = vld [vmem:[%s6 + $0x10] sm:$0xf]
  %v1786 = vld [vmem:[%s6 + $0x14] sm:$0xf]
  %v1787 = vld [vmem:[%s6 + $0x18] sm:$0xf]
  %v1788 = vld [vmem:[%s6 + $0x1c] sm:$0xf]
  %v1789 = vld [vmem:[%s6 + $0x20] sm:$0xf]
  %v1790 = vld [vmem:[%s6 + $0x24] sm:$0xf]
  %v1791 = vld [vmem:[%s6 + $0x28] sm:$0xf]
  %v1792 = vld [vmem:[%s6 + $0x2c] sm:$0xf]
  %v1793 = vld [vmem:[%s6 + $0x30] sm:$0xf]
  %v1794 = vld [vmem:[%s6 + $0x34] sm:$0xf]
  %v1795 = vld [vmem:[%s6 + $0x38] sm:$0xf]
  %v1796 = vld [vmem:[%s6 + $0x3c] sm:$0xf]
  %v1797 = vld [vmem:[%s6 + $0x40] sm:$0xf]
  %v1798 = vld [vmem:[%s6 + $0x44] sm:$0xf]
  %v1799 = vld [vmem:[%s6 + $0x48] sm:$0xf]
  %v1800 = vld [vmem:[%s6 + $0x4c] sm:$0xf]
  %v1801 = vld [vmem:[%s6 + $0x50] sm:$0xf]
  %v1802 = vld [vmem:[%s6 + $0x54] sm:$0xf]
  %v1803 = vld [vmem:[%s6 + $0x58] sm:$0xf]
  %v1804 = vld [vmem:[%s6 + $0x5c] sm:$0xf]
  %v1805 = vld [vmem:[%s6 + $0x60] sm:$0xf]
  %v1806 = vld [vmem:[%s6 + $0x64] sm:$0xf]
  %v1807 = vld [vmem:[%s6 + $0x68] sm:$0xf]
  %v1808 = vld [vmem:[%s6 + $0x6c] sm:$0xf]
  %v1809 = vld [vmem:[%s6 + $0x70] sm:$0xf]
  %v1810 = vld [vmem:[%s6 + $0x74] sm:$0xf]
  %v1811 = vld [vmem:[%s6 + $0x78] sm:$0xf]
  %v1812 = vld [vmem:[%s6 + $0x7c] sm:$0xf]
  %v1813 = vld [vmem:[%s6 + $0x80] sm:$0xf]
  %v1814 = vld [vmem:[%s6 + $0x84] sm:$0xf]
  %v1815 = vld [vmem:[%s6 + $0x88] sm:$0xf]
  %v1816 = vld [vmem:[%s6 + $0x8c] sm:$0xf]
  %v1817 = vld [vmem:[%s6 + $0x90] sm:$0xf]
  %v1818 = vld [vmem:[%s6 + $0x94] sm:$0xf]
  %v1819 = vld [vmem:[%s6 + $0x98] sm:$0xf]
  %v1820 = vld [vmem:[%s6 + $0x9c] sm:$0xf]
  %v1821 = vld [vmem:[%s6 + $0xa0] sm:$0xf]
  %v1822 = vld [vmem:[%s6 + $0xa4] sm:$0xf]
  %v1823 = vld [vmem:[%s6 + $0xa8] sm:$0xf]
  %v1824 = vld [vmem:[%s6 + $0xac] sm:$0xf]
  %v1825 = vld [vmem:[%s6 + $0xb0] sm:$0xf]
  %v1826 = vld [vmem:[%s6 + $0xb4] sm:$0xf]
  %v1827 = vld [vmem:[%s6 + $0xb8] sm:$0xf]
  %v1828 = vld [vmem:[%s6 + $0xbc] sm:$0xf]
  %v1877 = vunpack.c.l.b16 %v1781
  %v1878 = vunpack.c.l.b16 %v1782
  %v1879 = vunpack.c.l.b16 %v1783
  %v1880 = vunpack.c.l.b16 %v1784
  %v1881 = vunpack.c.l.b16 %v1785
  %v1882 = vunpack.c.l.b16 %v1786
  %v1883 = vunpack.c.l.b16 %v1787
  %v1884 = vunpack.c.l.b16 %v1788
  %v1885 = vunpack.c.l.b16 %v1789
  %v1886 = vunpack.c.l.b16 %v1790
  %v1887 = vunpack.c.l.b16 %v1791
  %v1888 = vunpack.c.l.b16 %v1792
  %v1889 = vunpack.c.l.b16 %v1793
  %v1890 = vunpack.c.l.b16 %v1794
  %v1891 = vunpack.c.l.b16 %v1795
  %v1892 = vunpack.c.l.b16 %v1796
  %v1893 = vunpack.c.l.b16 %v1797
  %v1894 = vunpack.c.l.b16 %v1798
  %v1895 = vunpack.c.l.b16 %v1799
  %v1896 = vunpack.c.l.b16 %v1800
  %v1897 = vunpack.c.l.b16 %v1801
  %v1898 = vunpack.c.l.b16 %v1802
  %v1899 = vunpack.c.l.b16 %v1803
  %v1900 = vunpack.c.l.b16 %v1804
  %v1901 = vunpack.c.l.b16 %v1805
  %v1902 = vunpack.c.l.b16 %v1806
  %v1903 = vunpack.c.l.b16 %v1807
  %v1904 = vunpack.c.l.b16 %v1808
  %v1905 = vunpack.c.l.b16 %v1809
  %v1906 = vunpack.c.l.b16 %v1810
  %v1907 = vunpack.c.l.b16 %v1811
  %v1908 = vunpack.c.l.b16 %v1812
  %v1909 = vunpack.c.l.b16 %v1813
  %v1910 = vunpack.c.l.b16 %v1814
  %v1911 = vunpack.c.l.b16 %v1815
  %v1912 = vunpack.c.l.b16 %v1816
  %v1913 = vunpack.c.l.b16 %v1817
  %v1914 = vunpack.c.l.b16 %v1818
  %v1915 = vunpack.c.l.b16 %v1819
  %v1916 = vunpack.c.l.b16 %v1820
  %v1917 = vunpack.c.l.b16 %v1821
  %v1918 = vunpack.c.l.b16 %v1822
  %v1919 = vunpack.c.l.b16 %v1823
  %v1920 = vunpack.c.l.b16 %v1824
  %v1921 = vunpack.c.l.b16 %v1825
  %v1922 = vunpack.c.l.b16 %v1826
  %v1923 = vunpack.c.l.b16 %v1827
  %v1924 = vunpack.c.l.b16 %v1828
  %v1925 = vpack.c.b16 %v1878, %v1877
  %v1926 = vpack.c.b16 %v1880, %v1879
  %v1927 = vpack.c.b16 %v1882, %v1881
  %v1928 = vpack.c.b16 %v1884, %v1883
  %v1929 = vpack.c.b16 %v1886, %v1885
  %v1930 = vpack.c.b16 %v1888, %v1887
  %v1931 = vpack.c.b16 %v1890, %v1889
  %v1932 = vpack.c.b16 %v1892, %v1891
  %v1933 = vpack.c.b16 %v1894, %v1893
  %v1934 = vpack.c.b16 %v1896, %v1895
  %v1935 = vpack.c.b16 %v1898, %v1897
  %v1936 = vpack.c.b16 %v1900, %v1899
  %v1937 = vpack.c.b16 %v1902, %v1901
  %v1938 = vpack.c.b16 %v1904, %v1903
  %v1939 = vpack.c.b16 %v1906, %v1905
  %v1940 = vpack.c.b16 %v1908, %v1907
  %v1941 = vpack.c.b16 %v1910, %v1909
  %v1942 = vpack.c.b16 %v1912, %v1911
  %v1943 = vpack.c.b16 %v1914, %v1913
  %v1944 = vpack.c.b16 %v1916, %v1915
  %v1945 = vpack.c.b16 %v1918, %v1917
  %v1946 = vpack.c.b16 %v1920, %v1919
  %v1947 = vpack.c.b16 %v1922, %v1921
  %v1948 = vpack.c.b16 %v1924, %v1923
  %1973 = vmatprep.subr.bf16.mxu0 0
  %1974 = vmatpush1.bf16.msra.mxu0 %v1925
  %1975 = vmatprep.subr.bf16.mxu0 0
  %1976 = vmatpush1.bf16.msra.mxu0 %v1926
  %1977 = vmatprep.subr.bf16.mxu0 0
  %1978 = vmatpush1.bf16.msra.mxu0 %v1927
  %1979 = vmatprep.subr.bf16.mxu0 0
  %1980 = vmatpush1.bf16.msra.mxu0 %v1928
  %1981 = vmatprep.subr.bf16.mxu0 0
  %1982 = vmatpush1.bf16.msra.mxu0 %v1929
  %1983 = vmatprep.subr.bf16.mxu0 0
  %1984 = vmatpush1.bf16.msra.mxu0 %v1930
  %1985 = vmatprep.subr.bf16.mxu0 0
  %1986 = vmatpush1.bf16.msra.mxu0 %v1931
  %1987 = vmatprep.subr.bf16.mxu0 0
  %1988 = vmatpush1.bf16.msra.mxu0 %v1932
  %1989 = vmatprep.subr.bf16.mxu0 0
  %1990 = vmatpush1.bf16.msra.mxu0 %v1933
  %1991 = vmatprep.subr.bf16.mxu0 0
  %1992 = vmatpush1.bf16.msra.mxu0 %v1934
  %1993 = vmatprep.subr.bf16.mxu0 0
  %1994 = vmatpush1.bf16.msra.mxu0 %v1935
  %1995 = vmatprep.subr.bf16.mxu0 0
  %1996 = vmatpush1.bf16.msra.mxu0 %v1936
  %1997 = vmatprep.subr.bf16.mxu0 0
  %1998 = vmatpush1.bf16.msra.mxu0 %v1937
  %1999 = vmatprep.subr.bf16.mxu0 0
  %2000 = vmatpush1.bf16.msra.mxu0 %v1938
  %2001 = vmatprep.subr.bf16.mxu0 0
  %2002 = vmatpush1.bf16.msra.mxu0 %v1939
  %2003 = vmatprep.subr.bf16.mxu0 0
  %2004 = vmatpush1.bf16.msra.mxu0 %v1940
  %2005 = vmatprep.mubr.bf16.mxu0 %v1776
  %2006 = vmatmul.mubr.bf16.gmra.mrb[0].mxu0 %v1775
  %v2007 = vpop.f32.mrb[0].mxu0
  %v2008 = vadd.f32 0.0, %v2007
  %v2009 = vpop.f32.mrb[0].mxu0
  %v2010 = vpop.f32.mrb[0].mxu0
  %v2011 = vadd.f32 0.0, %v2010
  %v2012 = vpop.f32.mrb[0].mxu0
  %2013 = vmatprep.mubr.bf16.mxu0 %v1779
  %2014 = vmatmul.mubr.bf16.gmra.mrb[0].mxu0 %v1778
  %v2015 = vpop.f32.mrb[0].mxu0
  %v2016 = vadd.f32 0.0, %v2015
  %v2017 = vpop.f32.mrb[0].mxu0
  %v2018 = vpop.f32.mrb[0].mxu0
  %v2019 = vadd.f32 0.0, %v2018
  %v2020 = vpop.f32.mrb[0].mxu0
  %2021 = vdwg.mxu0
  %2022 = vmatprep.subr.bf16.mxu0 0
  %2023 = vmatpush1.bf16.msra.mxu0 %v1941
  %2024 = vmatprep.subr.bf16.mxu0 0
  %2025 = vmatpush1.bf16.msra.mxu0 %v1942
  %2026 = vmatprep.subr.bf16.mxu0 0
  %2027 = vmatpush1.bf16.msra.mxu0 %v1943
  %2028 = vmatprep.subr.bf16.mxu0 0
  %2029 = vmatpush1.bf16.msra.mxu0 %v1944
  %2030 = vmatprep.subr.bf16.mxu0 0
  %2031 = vmatpush1.bf16.msra.mxu0 %v1945
  %2032 = vmatprep.subr.bf16.mxu0 0
  %2033 = vmatpush1.bf16.msra.mxu0 %v1946
  %2034 = vmatprep.subr.bf16.mxu0 0
  %2035 = vmatpush1.bf16.msra.mxu0 %v1947
  %2036 = vmatprep.subr.bf16.mxu0 0
  %2037 = vmatpush1.bf16.msra.mxu0 %v1948
  %2038 = vmatprep.subr.bf16.mxu0 0
  %2039 = vmatpush1.bf16.msra.mxu0 0
  %2040 = vmatprep.subr.bf16.mxu0 0
  %2041 = vmatpush1.bf16.msra.mxu0 0
  %2042 = vmatprep.subr.bf16.mxu0 0
  %2043 = vmatpush1.bf16.msra.mxu0 0
  %2044 = vmatprep.subr.bf16.mxu0 0
  %2045 = vmatpush1.bf16.msra.mxu0 0
  %2046 = vmatprep.subr.bf16.mxu0 0
  %2047 = vmatpush1.bf16.msra.mxu0 0
  %2048 = vmatprep.subr.bf16.mxu0 0
  %2049 = vmatpush1.bf16.msra.mxu0 0
  %2050 = vmatprep.subr.bf16.mxu0 0
  %2051 = vmatpush1.bf16.msra.mxu0 0
  %2052 = vmatprep.subr.bf16.mxu0 0
  %2053 = vmatpush1.bf16.msra.mxu0 0
  %2054 = vmatprep.mubr.bf16.mxu0 0
  %2055 = vmatmul.mubr.bf16.gmra.mrb[0].mxu0 %v1777
  %v2056 = vpop.f32.mrb[0].mxu0
  %v2057 = vadd.f32 %v2008, %v2056
  %v2058 = vpop.f32.mrb[0].mxu0
  %v2059 = vpop.f32.mrb[0].mxu0
  %v2060 = vadd.f32 %v2011, %v2059
  %v2061 = vpop.f32.mrb[0].mxu0
  %2062 = vmatprep.mubr.bf16.mxu0 0
  %2063 = vmatmul.mubr.bf16.gmra.mrb[0].mxu0 %v1780
  %v2064 = vpop.f32.mrb[0].mxu0
  %v2065 = vadd.f32 %v2016, %v2064
  %v2066 = vpop.f32.mrb[0].mxu0
  %v2067 = vpop.f32.mrb[0].mxu0
  %v2068 = vadd.f32 %v2019, %v2067
  %v2069 = vpop.f32.mrb[0].mxu0
  %2070 = vdwg.mxu0
  %v2071 = vadd.f32 %v2057, %v2060
  %v2072 = vadd.f32 %v2071, %v2065
  %v2073 = vadd.f32 %v2072, %v2068
  %v2074 = vrot.slane %v2073, 4
  %v2075 = vadd.f32 %v2073, %v2074
  %v2076 = vrot.slane %v2075, 2
  %v2077 = vadd.f32 %v2075, %v2076
  %v2078 = vrot.slane %v2077, 1
  %v2079 = vadd.f32 %v2077, %v2078
  %v2080 = vmul.f32 %v2057, %v2057
  %v2081 = vmul.f32 %v2060, %v2060
  %v2082 = vmul.f32 %v2065, %v2065
  %v2083 = vmul.f32 %v2068, %v2068
  %v2084 = vadd.f32 %v2080, %v2081
  %v2085 = vadd.f32 %v2084, %v2082
  %v2086 = vadd.f32 %v2085, %v2083
  %v2087 = vrot.slane %v2086, 4
  %v2088 = vadd.f32 %v2086, %v2087
  %v2089 = vrot.slane %v2088, 2
  %v2090 = vadd.f32 %v2088, %v2089
  %v2091 = vrot.slane %v2090, 1
  %v2092 = vadd.f32 %v2090, %v2091
  %v2093 = vsel %vm472, %v2079, %v2092
  %2094 = vrot.lane.b32.xlu0 %v2093, 8
  %v2095 = vpop.permute.xlu0 %2094
  %v2096 = vadd.f32 %v2093, %v2095
  %2097 = vrot.lane.b32.xlu0 %v2096, 16
  %v2098 = vpop.permute.xlu0 %2097
  %v2099 = vadd.f32 %v2096, %v2098
  %2100 = vrot.lane.b32.xlu0 %v2099, 32
  %v2101 = vpop.permute.xlu0 %2100
  %v2102 = vadd.f32 %v2099, %v2101
  %2103 = vrot.lane.b32.xlu0 %v2102, 64
  %v2104 = vpop.permute.xlu0 %2103
  %v2105 = vadd.f32 %v2102, %v2104
  %v2106 = vmul.f32 %v2105, 0.001953125
  %v2107 = vmul.f32 %v2106, %v2106
  %v2109 = vrot.slane %v2107, 7
  %v2111 = vsub.f32 %v2106, %v2109
  %v2112 = vmax.f32 %v2111, 0.0
  %v2113 = vld [vmem:[%s7] sm:$0x1]
  %v2114 = vadd.f32 %v2112, 1e-05
  %v2115 = vrsqrt.pop %v2114
  %v2118 = vunpack.c.l.s4 1966171168
  %v2119 = vunpack.c.0.s8 %v2118
  %v2120 = vlaneseq
  %v2121 = vshrl.u32 %v2120, 7
  %v2122 = vsub.s32 %v2119, %v2121
  %v2123 = vrot.slane %v2115, %v2122
  %v2124 = vcombine.high %v2123, %v2123
  %v2126 = vunpack.c.l.s4 1966171168
  %v2127 = vunpack.c.0.s8 %v2126
  %v2128 = vlaneseq
  %v2129 = vshrl.u32 %v2128, 7
  %v2130 = vsub.s32 %v2127, %v2129
  %v2131 = vrot.slane %v2124, %v2130
  %v2133 = vmul.f32 %v2113, %v2131
  %v2134 = vld [vmem:[%s8] sm:$0x1]
  %v2135 = vmul.f32 %v2106, %v2133
  %v2136 = vsub.f32 %v2134, %v2135
  %v2138 = vlaneseq
  %v2139 = vshrl.u32 %v2138, 7
  %v2140 = vsub.s32 0, %v2139
  %v2141 = vrot.slane %v2133, %v2140
  %v2143 = vmul.f32 %v2057, %v2141
  %v2144 = vmul.f32 %v2060, %v2141
  %v2145 = vmul.f32 %v2065, %v2141
  %v2146 = vmul.f32 %v2068, %v2141
  %v2148 = vlaneseq
  %v2149 = vshrl.u32 %v2148, 7
  %v2150 = vsub.s32 0, %v2149
  %v2151 = vrot.slane %v2136, %v2150
  %v2153 = vadd.f32 %v2143, %v2151
  %v2154 = vadd.f32 %v2144, %v2151
  %v2155 = vadd.f32 %v2145, %v2151
  %v2156 = vadd.f32 %v2146, %v2151
  %v2157 = vmax.f32 %v2153, 0.0
  %v2158 = vmax.f32 %v2154, 0.0
  %v2159 = vmax.f32 %v2155, 0.0
  %v2160 = vmax.f32 %v2156, 0.0
  %v2161 = vadd.f32 %v1349, %v2157
  %v2162 = vadd.f32 %v1350, %v2158
  %v2163 = vadd.f32 %v1351, %v2159
  %v2164 = vadd.f32 %v1352, %v2160
  %2165 = vst [vmem:[#allocation2 + $0x8] sm:$0xff] %v2161
  %2166 = vst [vmem:[#allocation2 + $0x10] sm:$0xff] %v2162
  %2167 = vst [vmem:[#allocation2 + $0x28] sm:$0xff] %v2163
  %2168 = vst [vmem:[#allocation2 + $0x30] sm:$0xff] %v2164
  %v2169 = vld [vmem:[#allocation2 + $0x7] sm:$0xff]
  %v2170 = vld [vmem:[#allocation2 + $0xf] sm:$0xff]
  %v2171 = vld [vmem:[#allocation2 + $0x27] sm:$0xff]
  %v2172 = vld [vmem:[#allocation2 + $0x2f] sm:$0xff]
  %v2173 = vld [vmem:[#allocation2 + $0x8] sm:$0xff]
  %v2174 = vld [vmem:[#allocation2 + $0x10] sm:$0xff]
  %v2175 = vld [vmem:[#allocation2 + $0x28] sm:$0xff]
  %v2176 = vld [vmem:[#allocation2 + $0x30] sm:$0xff]
  %v2177 = vld [vmem:[#allocation2 + $0x9] sm:$0xff]
  %v2178 = vld [vmem:[#allocation2 + $0x11] sm:$0xff]
  %v2179 = vld [vmem:[#allocation2 + $0x29] sm:$0xff]
  %v2180 = vld [vmem:[#allocation2 + $0x31] sm:$0xff]
  %v2181 = vpack.c.bf16 %v2170, %v2169
  %v2182 = vpack.c.bf16 %v2174, %v2173
  %v2183 = vpack.c.bf16 %v2178, %v2177
  %v2184 = vpack.c.bf16 %v2172, %v2171
  %v2185 = vpack.c.bf16 %v2176, %v2175
  %v2186 = vpack.c.bf16 %v2180, %v2179
  %v2187 = vld [vmem:[%s6] sm:$0xf]
  %v2188 = vld [vmem:[%s6 + $0x4] sm:$0xf]
  %v2189 = vld [vmem:[%s6 + $0x8] sm:$0xf]
  %v2190 = vld [vmem:[%s6 + $0xc] sm:$0xf]
  %v2191 = vld [vmem:[%s6 + $0x10] sm:$0xf]
  %v2192 = vld [vmem:[%s6 + $0x14] sm:$0xf]
  %v2193 = vld [vmem:[%s6 + $0x18] sm:$0xf]
  %v2194 = vld [vmem:[%s6 + $0x1c] sm:$0xf]
  %v2195 = vld [vmem:[%s6 + $0x20] sm:$0xf]
  %v2196 = vld [vmem:[%s6 + $0x24] sm:$0xf]
  %v2197 = vld [vmem:[%s6 + $0x28] sm:$0xf]
  %v2198 = vld [vmem:[%s6 + $0x2c] sm:$0xf]
  %v2199 = vld [vmem:[%s6 + $0x30] sm:$0xf]
  %v2200 = vld [vmem:[%s6 + $0x34] sm:$0xf]
  %v2201 = vld [vmem:[%s6 + $0x38] sm:$0xf]
  %v2202 = vld [vmem:[%s6 + $0x3c] sm:$0xf]
  %v2203 = vld [vmem:[%s6 + $0x40] sm:$0xf]
  %v2204 = vld [vmem:[%s6 + $0x44] sm:$0xf]
  %v2205 = vld [vmem:[%s6 + $0x48] sm:$0xf]
  %v2206 = vld [vmem:[%s6 + $0x4c] sm:$0xf]
  %v2207 = vld [vmem:[%s6 + $0x50] sm:$0xf]
  %v2208 = vld [vmem:[%s6 + $0x54] sm:$0xf]
  %v2209 = vld [vmem:[%s6 + $0x58] sm:$0xf]
  %v2210 = vld [vmem:[%s6 + $0x5c] sm:$0xf]
  %v2211 = vld [vmem:[%s6 + $0x60] sm:$0xf]
  %v2212 = vld [vmem:[%s6 + $0x64] sm:$0xf]
  %v2213 = vld [vmem:[%s6 + $0x68] sm:$0xf]
  %v2214 = vld [vmem:[%s6 + $0x6c] sm:$0xf]
  %v2215 = vld [vmem:[%s6 + $0x70] sm:$0xf]
  %v2216 = vld [vmem:[%s6 + $0x74] sm:$0xf]
  %v2217 = vld [vmem:[%s6 + $0x78] sm:$0xf]
  %v2218 = vld [vmem:[%s6 + $0x7c] sm:$0xf]
  %v2219 = vld [vmem:[%s6 + $0x80] sm:$0xf]
  %v2220 = vld [vmem:[%s6 + $0x84] sm:$0xf]
  %v2221 = vld [vmem:[%s6 + $0x88] sm:$0xf]
  %v2222 = vld [vmem:[%s6 + $0x8c] sm:$0xf]
  %v2223 = vld [vmem:[%s6 + $0x90] sm:$0xf]
  %v2224 = vld [vmem:[%s6 + $0x94] sm:$0xf]
  %v2225 = vld [vmem:[%s6 + $0x98] sm:$0xf]
  %v2226 = vld [vmem:[%s6 + $0x9c] sm:$0xf]
  %v2227 = vld [vmem:[%s6 + $0xa0] sm:$0xf]
  %v2228 = vld [vmem:[%s6 + $0xa4] sm:$0xf]
  %v2229 = vld [vmem:[%s6 + $0xa8] sm:$0xf]
  %v2230 = vld [vmem:[%s6 + $0xac] sm:$0xf]
  %v2231 = vld [vmem:[%s6 + $0xb0] sm:$0xf]
  %v2232 = vld [vmem:[%s6 + $0xb4] sm:$0xf]
  %v2233 = vld [vmem:[%s6 + $0xb8] sm:$0xf]
  %v2234 = vld [vmem:[%s6 + $0xbc] sm:$0xf]
  %v2283 = vunpack.c.l.b16 %v2187
  %v2284 = vunpack.c.l.b16 %v2188
  %v2285 = vunpack.c.l.b16 %v2189
  %v2286 = vunpack.c.l.b16 %v2190
  %v2287 = vunpack.c.l.b16 %v2191
  %v2288 = vunpack.c.l.b16 %v2192
  %v2289 = vunpack.c.l.b16 %v2193
  %v2290 = vunpack.c.l.b16 %v2194
  %v2291 = vunpack.c.l.b16 %v2195
  %v2292 = vunpack.c.l.b16 %v2196
  %v2293 = vunpack.c.l.b16 %v2197
  %v2294 = vunpack.c.l.b16 %v2198
  %v2295 = vunpack.c.l.b16 %v2199
  %v2296 = vunpack.c.l.b16 %v2200
  %v2297 = vunpack.c.l.b16 %v2201
  %v2298 = vunpack.c.l.b16 %v2202
  %v2299 = vunpack.c.l.b16 %v2203
  %v2300 = vunpack.c.l.b16 %v2204
  %v2301 = vunpack.c.l.b16 %v2205
  %v2302 = vunpack.c.l.b16 %v2206
  %v2303 = vunpack.c.l.b16 %v2207
  %v2304 = vunpack.c.l.b16 %v2208
  %v2305 = vunpack.c.l.b16 %v2209
  %v2306 = vunpack.c.l.b16 %v2210
  %v2307 = vunpack.c.l.b16 %v2211
  %v2308 = vunpack.c.l.b16 %v2212
  %v2309 = vunpack.c.l.b16 %v2213
  %v2310 = vunpack.c.l.b16 %v2214
  %v2311 = vunpack.c.l.b16 %v2215
  %v2312 = vunpack.c.l.b16 %v2216
  %v2313 = vunpack.c.l.b16 %v2217
  %v2314 = vunpack.c.l.b16 %v2218
  %v2315 = vunpack.c.l.b16 %v2219
  %v2316 = vunpack.c.l.b16 %v2220
  %v2317 = vunpack.c.l.b16 %v2221
  %v2318 = vunpack.c.l.b16 %v2222
  %v2319 = vunpack.c.l.b16 %v2223
  %v2320 = vunpack.c.l.b16 %v2224
  %v2321 = vunpack.c.l.b16 %v2225
  %v2322 = vunpack.c.l.b16 %v2226
  %v2323 = vunpack.c.l.b16 %v2227
  %v2324 = vunpack.c.l.b16 %v2228
  %v2325 = vunpack.c.l.b16 %v2229
  %v2326 = vunpack.c.l.b16 %v2230
  %v2327 = vunpack.c.l.b16 %v2231
  %v2328 = vunpack.c.l.b16 %v2232
  %v2329 = vunpack.c.l.b16 %v2233
  %v2330 = vunpack.c.l.b16 %v2234
  %v2331 = vpack.c.b16 %v2284, %v2283
  %v2332 = vpack.c.b16 %v2286, %v2285
  %v2333 = vpack.c.b16 %v2288, %v2287
  %v2334 = vpack.c.b16 %v2290, %v2289
  %v2335 = vpack.c.b16 %v2292, %v2291
  %v2336 = vpack.c.b16 %v2294, %v2293
  %v2337 = vpack.c.b16 %v2296, %v2295
  %v2338 = vpack.c.b16 %v2298, %v2297
  %v2339 = vpack.c.b16 %v2300, %v2299
  %v2340 = vpack.c.b16 %v2302, %v2301
  %v2341 = vpack.c.b16 %v2304, %v2303
  %v2342 = vpack.c.b16 %v2306, %v2305
  %v2343 = vpack.c.b16 %v2308, %v2307
  %v2344 = vpack.c.b16 %v2310, %v2309
  %v2345 = vpack.c.b16 %v2312, %v2311
  %v2346 = vpack.c.b16 %v2314, %v2313
  %v2347 = vpack.c.b16 %v2316, %v2315
  %v2348 = vpack.c.b16 %v2318, %v2317
  %v2349 = vpack.c.b16 %v2320, %v2319
  %v2350 = vpack.c.b16 %v2322, %v2321
  %v2351 = vpack.c.b16 %v2324, %v2323
  %v2352 = vpack.c.b16 %v2326, %v2325
  %v2353 = vpack.c.b16 %v2328, %v2327
  %v2354 = vpack.c.b16 %v2330, %v2329
  %2379 = vmatprep.subr.bf16.mxu0 0
  %2380 = vmatpush1.bf16.msra.mxu0 %v2331
  %2381 = vmatprep.subr.bf16.mxu0 0
  %2382 = vmatpush1.bf16.msra.mxu0 %v2332
  %2383 = vmatprep.subr.bf16.mxu0 0
  %2384 = vmatpush1.bf16.msra.mxu0 %v2333
  %2385 = vmatprep.subr.bf16.mxu0 0
  %2386 = vmatpush1.bf16.msra.mxu0 %v2334
  %2387 = vmatprep.subr.bf16.mxu0 0
  %2388 = vmatpush1.bf16.msra.mxu0 %v2335
  %2389 = vmatprep.subr.bf16.mxu0 0
  %2390 = vmatpush1.bf16.msra.mxu0 %v2336
  %2391 = vmatprep.subr.bf16.mxu0 0
  %2392 = vmatpush1.bf16.msra.mxu0 %v2337
  %2393 = vmatprep.subr.bf16.mxu0 0
  %2394 = vmatpush1.bf16.msra.mxu0 %v2338
  %2395 = vmatprep.subr.bf16.mxu0 0
  %2396 = vmatpush1.bf16.msra.mxu0 %v2339
  %2397 = vmatprep.subr.bf16.mxu0 0
  %2398 = vmatpush1.bf16.msra.mxu0 %v2340
  %2399 = vmatprep.subr.bf16.mxu0 0
  %2400 = vmatpush1.bf16.msra.mxu0 %v2341
  %2401 = vmatprep.subr.bf16.mxu0 0
  %2402 = vmatpush1.bf16.msra.mxu0 %v2342
  %2403 = vmatprep.subr.bf16.mxu0 0
  %2404 = vmatpush1.bf16.msra.mxu0 %v2343
  %2405 = vmatprep.subr.bf16.mxu0 0
  %2406 = vmatpush1.bf16.msra.mxu0 %v2344
  %2407 = vmatprep.subr.bf16.mxu0 0
  %2408 = vmatpush1.bf16.msra.mxu0 %v2345
  %2409 = vmatprep.subr.bf16.mxu0 0
  %2410 = vmatpush1.bf16.msra.mxu0 %v2346
  %2411 = vmatprep.mubr.bf16.mxu0 %v2182
  %2412 = vmatmul.mubr.bf16.gmra.mrb[0].mxu0 %v2181
  %v2413 = vpop.f32.mrb[0].mxu0
  %v2414 = vadd.f32 0.0, %v2413
  %v2415 = vpop.f32.mrb[0].mxu0
  %v2416 = vpop.f32.mrb[0].mxu0
  %v2417 = vadd.f32 0.0, %v2416
  %v2418 = vpop.f32.mrb[0].mxu0
  %2419 = vmatprep.mubr.bf16.mxu0 %v2185
  %2420 = vmatmul.mubr.bf16.gmra.mrb[0].mxu0 %v2184
  %v2421 = vpop.f32.mrb[0].mxu0
  %v2422 = vadd.f32 0.0, %v2421
  %v2423 = vpop.f32.mrb[0].mxu0
  %v2424 = vpop.f32.mrb[0].mxu0
  %v2425 = vadd.f32 0.0, %v2424
  %v2426 = vpop.f32.mrb[0].mxu0
  %2427 = vdwg.mxu0
  %2428 = vmatprep.subr.bf16.mxu0 0
  %2429 = vmatpush1.bf16.msra.mxu0 %v2347
  %2430 = vmatprep.subr.bf16.mxu0 0
  %2431 = vmatpush1.bf16.msra.mxu0 %v2348
  %2432 = vmatprep.subr.bf16.mxu0 0
  %2433 = vmatpush1.bf16.msra.mxu0 %v2349
  %2434 = vmatprep.subr.bf16.mxu0 0
  %2435 = vmatpush1.bf16.msra.mxu0 %v2350
  %2436 = vmatprep.subr.bf16.mxu0 0
  %2437 = vmatpush1.bf16.msra.mxu0 %v2351
  %2438 = vmatprep.subr.bf16.mxu0 0
  %2439 = vmatpush1.bf16.msra.mxu0 %v2352
  %2440 = vmatprep.subr.bf16.mxu0 0
  %2441 = vmatpush1.bf16.msra.mxu0 %v2353
  %2442 = vmatprep.subr.bf16.mxu0 0
  %2443 = vmatpush1.bf16.msra.mxu0 %v2354
  %2444 = vmatprep.subr.bf16.mxu0 0
  %2445 = vmatpush1.bf16.msra.mxu0 0
  %2446 = vmatprep.subr.bf16.mxu0 0
  %2447 = vmatpush1.bf16.msra.mxu0 0
  %2448 = vmatprep.subr.bf16.mxu0 0
  %2449 = vmatpush1.bf16.msra.mxu0 0
  %2450 = vmatprep.subr.bf16.mxu0 0
  %2451 = vmatpush1.bf16.msra.mxu0 0
  %2452 = vmatprep.subr.bf16.mxu0 0
  %2453 = vmatpush1.bf16.msra.mxu0 0
  %2454 = vmatprep.subr.bf16.mxu0 0
  %2455 = vmatpush1.bf16.msra.mxu0 0
  %2456 = vmatprep.subr.bf16.mxu0 0
  %2457 = vmatpush1.bf16.msra.mxu0 0
  %2458 = vmatprep.subr.bf16.mxu0 0
  %2459 = vmatpush1.bf16.msra.mxu0 0
  %2460 = vmatprep.mubr.bf16.mxu0 0
  %2461 = vmatmul.mubr.bf16.gmra.mrb[0].mxu0 %v2183
  %v2462 = vpop.f32.mrb[0].mxu0
  %v2463 = vadd.f32 %v2414, %v2462
  %v2464 = vpop.f32.mrb[0].mxu0
  %v2465 = vpop.f32.mrb[0].mxu0
  %v2466 = vadd.f32 %v2417, %v2465
  %v2467 = vpop.f32.mrb[0].mxu0
  %2468 = vmatprep.mubr.bf16.mxu0 0
  %2469 = vmatmul.mubr.bf16.gmra.mrb[0].mxu0 %v2186
  %v2470 = vpop.f32.mrb[0].mxu0
  %v2471 = vadd.f32 %v2422, %v2470
  %v2472 = vpop.f32.mrb[0].mxu0
  %v2473 = vpop.f32.mrb[0].mxu0
  %v2474 = vadd.f32 %v2425, %v2473
  %v2475 = vpop.f32.mrb[0].mxu0
  %2476 = vdwg.mxu0
  %v2477 = vadd.f32 %v2463, %v2466
  %v2478 = vadd.f32 %v2477, %v2471
  %v2479 = vadd.f32 %v2478, %v2474
  %v2480 = vrot.slane %v2479, 4
  %v2481 = vadd.f32 %v2479, %v2480
  %v2482 = vrot.slane %v2481, 2
  %v2483 = vadd.f32 %v2481, %v2482
  %v2484 = vrot.slane %v2483, 1
  %v2485 = vadd.f32 %v2483, %v2484
  %v2486 = vmul.f32 %v2463, %v2463
  %v2487 = vmul.f32 %v2466, %v2466
  %v2488 = vmul.f32 %v2471, %v2471
  %v2489 = vmul.f32 %v2474, %v2474
  %v2490 = vadd.f32 %v2486, %v2487
  %v2491 = vadd.f32 %v2490, %v2488
  %v2492 = vadd.f32 %v2491, %v2489
  %v2493 = vrot.slane %v2492, 4
  %v2494 = vadd.f32 %v2492, %v2493
  %v2495 = vrot.slane %v2494, 2
  %v2496 = vadd.f32 %v2494, %v2495
  %v2497 = vrot.slane %v2496, 1
  %v2498 = vadd.f32 %v2496, %v2497
  %v2499 = vsel %vm472, %v2485, %v2498
  %2500 = vrot.lane.b32.xlu0 %v2499, 8
  %v2501 = vpop.permute.xlu0 %2500
  %v2502 = vadd.f32 %v2499, %v2501
  %2503 = vrot.lane.b32.xlu0 %v2502, 16
  %v2504 = vpop.permute.xlu0 %2503
  %v2505 = vadd.f32 %v2502, %v2504
  %2506 = vrot.lane.b32.xlu0 %v2505, 32
  %v2507 = vpop.permute.xlu0 %2506
  %v2508 = vadd.f32 %v2505, %v2507
  %2509 = vrot.lane.b32.xlu0 %v2508, 64
  %v2510 = vpop.permute.xlu0 %2509
  %v2511 = vadd.f32 %v2508, %v2510
  %v2512 = vmul.f32 %v2511, 0.001953125
  %v2513 = vmul.f32 %v2512, %v2512
  %v2515 = vrot.slane %v2513, 7
  %v2517 = vsub.f32 %v2512, %v2515
  %v2518 = vmax.f32 %v2517, 0.0
  %v2519 = vld [vmem:[%s7] sm:$0x1]
  %v2520 = vadd.f32 %v2518, 1e-05
  %v2521 = vrsqrt.pop %v2520
  %v2524 = vunpack.c.l.s4 1966171168
  %v2525 = vunpack.c.0.s8 %v2524
  %v2526 = vlaneseq
  %v2527 = vshrl.u32 %v2526, 7
  %v2528 = vsub.s32 %v2525, %v2527
  %v2529 = vrot.slane %v2521, %v2528
  %v2530 = vcombine.high %v2529, %v2529
  %v2532 = vunpack.c.l.s4 1966171168
  %v2533 = vunpack.c.0.s8 %v2532
  %v2534 = vlaneseq
  %v2535 = vshrl.u32 %v2534, 7
  %v2536 = vsub.s32 %v2533, %v2535
  %v2537 = vrot.slane %v2530, %v2536
  %v2539 = vmul.f32 %v2519, %v2537
  %v2540 = vld [vmem:[%s8] sm:$0x1]
  %v2541 = vmul.f32 %v2512, %v2539
  %v2542 = vsub.f32 %v2540, %v2541
  %v2544 = vlaneseq
  %v2545 = vshrl.u32 %v2544, 7
  %v2546 = vsub.s32 0, %v2545
  %v2547 = vrot.slane %v2539, %v2546
  %v2549 = vmul.f32 %v2463, %v2547
  %v2550 = vmul.f32 %v2466, %v2547
  %v2551 = vmul.f32 %v2471, %v2547
  %v2552 = vmul.f32 %v2474, %v2547
  %v2554 = vlaneseq
  %v2555 = vshrl.u32 %v2554, 7
  %v2556 = vsub.s32 0, %v2555
  %v2557 = vrot.slane %v2542, %v2556
  %v2559 = vadd.f32 %v2549, %v2557
  %v2560 = vadd.f32 %v2550, %v2557
  %v2561 = vadd.f32 %v2551, %v2557
  %v2562 = vadd.f32 %v2552, %v2557
  %v2563 = vmax.f32 %v2559, 0.0
  %v2564 = vmax.f32 %v2560, 0.0
  %v2565 = vmax.f32 %v2561, 0.0
  %v2566 = vmax.f32 %v2562, 0.0
  %v2567 = vadd.f32 %v124, %v2563
  %v2568 = vadd.f32 %v127, %v2564
  %v2569 = vadd.f32 %v132, %v2565
  %v2570 = vadd.f32 %v135, %v2566
  %2571 = vst [vmem:[%s9] sm:$0xff] %v2567
  %2572 = vst [vmem:[%s9 + $0x8] sm:$0xff] %v2568
  %2573 = vst [vmem:[%s9 + $0x10] sm:$0xff] %v2569
  %2574 = vst [vmem:[%s9 + $0x18] sm:$0xff] %v2570
  // Predicated region
  $region38: #{rrcnn_block.1} parent=0 // pred_check
    _
  $region39: #{rrcnn_block.1} parent=0 // pred_check_branch
    %2576 = sbr.rel (0) target = $region41
  $region40: #{rrcnn_block.1} parent=0 // pred_region
    _
  $region41: #{rrcnn_block.1} parent=0 // pred_fallthru
    _
  // Predicated region
  $region42: #{rrcnn_block.1} parent=0 // pred_check
    _
  $region43: #{rrcnn_block.1} parent=0 // pred_check_branch
    %2578 = sbr.rel (0) target = $region45
  $region44: #{rrcnn_block.1} parent=0 // pred_region
    _
  $region45: #{rrcnn_block.1} parent=0 // pred_fallthru
    _

</llo_original>
